<compile_context>
chip_gen: v7x
topology: tpu7x:2x2x1
jax: 0.10.0
libtpu: 0.0.40
codegen_flags: <defaults>
</compile_context>

<pallas_src>
import jax
import jax.numpy as jnp
from jax.experimental import pallas as pl
from jax.experimental.pallas import tpu as pltpu


def reward_embed_kernel(x_ref, w_ref, b_ref, o_ref):
    # x_ref: (TB, 1), w_ref: (1, D), b_ref: (1, D), o_ref: (TB, D)
    # K=1 contraction -> pure VPU broadcast multiply-add (one vmul+vadd/vreg).
    o_ref[...] = (x_ref[...] * w_ref[...] + b_ref[...]).astype(o_ref.dtype)


def _round_up(x, m):
    return ((x + m - 1) // m) * m


def _round_down(x, m):
    return (x // m) * m


# Stay under the 32 MiB scoped-VMEM default on every generation (v7x physical
# VMEM is 64 MiB), leaving headroom for weight/bias and compiler scratch.
_VMEM_BUDGET_BYTES = 24 * 1024 * 1024
_FASTPATH_OUT_BYTES = 1 << 20  # below this, XLA fusion beats a standalone call


def _pick_tile_b(B, D, out_bytes, max_tile_b=None):
    """Batch tile: multiple of 8, sized so double-buffered blocks fit VMEM."""
    lane_d = _round_up(D, 128)              # VMEM lane padding
    per_row = 2 * lane_d * out_bytes + 2 * 128 * 4   # out dbuf + reward dbuf (f32)
    tb = _round_down(max(_VMEM_BUDGET_BYTES // per_row, 8), 8)
    tb = max(8, tb)
    if max_tile_b is not None:
        tb = max(8, _round_down(min(tb, max_tile_b), 8))
    if tb >= B:
        # Single block; block dims equal to the full array dims are always legal.
        return B
    return tb


def reward_embed(reward, weight, bias, *, out_dtype=None, max_tile_b=None,
                 small_batch_fastpath=True):
    """reward: (B, 1), weight: (1, D), bias: (D,) -> (B, D).

    Equivalent to nn.Linear(1, D)(reward) with weight pre-transposed to (1, D).
    """
    B = reward.shape[0]
    D = weight.shape[1]
    if out_dtype is None:
        out_dtype = reward.dtype
    out_bytes = jnp.dtype(out_dtype).itemsize

    # Tiny outputs: launch + DMA setup dominates a standalone kernel; let XLA
    # fuse the broadcast multiply-add into the consumer instead.
    if small_batch_fastpath and B * D * out_bytes < _FASTPATH_OUT_BYTES:
        return (reward * weight + bias[None, :]).astype(out_dtype)

    bias2d = bias.reshape(1, D)
    TB = _pick_tile_b(B, D, out_bytes, max_tile_b)
    grid = (pl.cdiv(B, TB),)

    cost = pl.CostEstimate(
        flops=2 * B * D,
        transcendentals=0,
        bytes_accessed=B * D * out_bytes + 4 * (B + 2 * D),
    )

    return pl.pallas_call(
        reward_embed_kernel,
        out_shape=jax.ShapeDtypeStruct((B, D), out_dtype),
        grid=grid,
        in_specs=[
            pl.BlockSpec((TB, 1), lambda i: (i, 0)),  # reward tile
            pl.BlockSpec((1, D), lambda i: (0, 0)),   # weight, VMEM-resident
            pl.BlockSpec((1, D), lambda i: (0, 0)),   # bias,   VMEM-resident
        ],
        out_specs=pl.BlockSpec((TB, D), lambda i: (i, 0)),
        compiler_params=pltpu.CompilerParams(
            dimension_semantics=("parallel",),
        ),
        cost_estimate=cost,
    )(reward, weight, bias2d)


def reference(reward, weight, bias):
    return reward @ weight + bias[None, :]


if __name__ == "__main__":
    key = jax.random.PRNGKey(0)
    k_w, k_b, k_x1, k_x2, k_x3 = jax.random.split(key, 5)

    D = 512
    # nn.Linear(1, D): weight (D, 1), bias (D,), uniform(-1, 1) since fan_in=1.
    # Stored pre-transposed as (1, D) for the kernel.
    weight = jax.random.uniform(k_w, (1, D), jnp.float32, minval=-1.0, maxval=1.0)
    bias = jax.random.uniform(k_b, (D,), jnp.float32, minval=-1.0, maxval=1.0)

    # --- Case 1: module-default small batch -> small-size fast path (XLA fuses) ---
    r1 = jax.random.normal(k_x1, (8, 1), jnp.float32)
    o1 = jax.block_until_ready(reward_embed(r1, weight, bias))
    assert o1.shape == (8, D)
    assert jnp.allclose(o1, reference(r1, weight, bias), atol=1e-5, rtol=1e-5)

    # --- Case 2: tiled Pallas path, multi-step grid with ragged last batch block ---
    B2 = 5000
    r2 = jax.random.normal(k_x2, (B2, 1), jnp.float32)
    o2 = jax.block_until_ready(reward_embed(r2, weight, bias, max_tile_b=1024))
    assert o2.shape == (B2, D)
    assert jnp.allclose(o2, reference(r2, weight, bias), atol=1e-5, rtol=1e-5)

    # --- Case 3: ragged B and D through the Pallas path (full-dim blocks) ---
    D3 = 200
    w3 = weight[:, :D3]
    b3 = bias[:D3]
    r3 = jax.random.normal(k_x3, (13, 1), jnp.float32)
    o3 = jax.block_until_ready(
        reward_embed(r3, w3, b3, small_batch_fastpath=False))
    assert o3.shape == (13, D3)
    assert jnp.allclose(o3, reference(r3, w3, b3), atol=1e-5, rtol=1e-5)

    print("KERNEL_OK")
</pallas_src>

<mosaic_0001>
module attributes {stable_mosaic.version = 11 : i64} {
  func.func @reward_embed_kernel(%arg0: i32, %arg1: memref<1024x1xf32, #tpu.memory_space<vmem>>, %arg2: memref<1x512xf32, #tpu.memory_space<vmem>>, %arg3: memref<1x512xf32, #tpu.memory_space<vmem>>, %arg4: memref<1024x512xf32, #tpu.memory_space<vmem>>) attributes {dimension_semantics = [#tpu.dimension_semantics<parallel>], iteration_bounds = array<i64: 5>, scalar_prefetch = 0 : i64, scratch_operands = 0 : i64, tpu.core_type = #tpu.core_type<tc>, window_params = [{transform_indices = @transform_0, window_bounds = array<i64: 1024, 1>}, {pipeline_mode = #tpu.pipeline_mode<synchronous>, transform_indices = @transform_1, window_bounds = array<i64: 1, 512>}, {pipeline_mode = #tpu.pipeline_mode<synchronous>, transform_indices = @transform_2, window_bounds = array<i64: 1, 512>}, {transform_indices = @transform_3, window_bounds = array<i64: 1024, 512>}]} {
    %c0 = arith.constant 0 : index
    %c0_0 = arith.constant 0 : index
    %0 = vector.load %arg1[%c0, %c0_0] : memref<1024x1xf32, #tpu.memory_space<vmem>>, vector<1024x1xf32>
    %c0_1 = arith.constant 0 : index
    %c0_2 = arith.constant 0 : index
    %1 = vector.load %arg2[%c0_1, %c0_2] : memref<1x512xf32, #tpu.memory_space<vmem>>, vector<1x512xf32>
    %2 = vector.broadcast %0 : vector<1024x1xf32> to vector<1024x512xf32>
    %3 = vector.broadcast %1 : vector<1x512xf32> to vector<1024x512xf32>
    %4 = arith.mulf %2, %3 : vector<1024x512xf32>
    %c0_3 = arith.constant 0 : index
    %c0_4 = arith.constant 0 : index
    %5 = vector.load %arg3[%c0_3, %c0_4] : memref<1x512xf32, #tpu.memory_space<vmem>>, vector<1x512xf32>
    %6 = vector.broadcast %5 : vector<1x512xf32> to vector<1024x512xf32>
    %7 = arith.addf %4, %6 : vector<1024x512xf32>
    %c0_5 = arith.constant 0 : index
    %c0_6 = arith.constant 0 : index
    %8 = vector.load %arg4[%c0_5, %c0_6] : memref<1024x512xf32, #tpu.memory_space<vmem>>, vector<1024x512xf32>
    tpu.vector_store %arg4[%c0_5, %c0_6], %7 {strides = array<i32>} : memref<1024x512xf32, #tpu.memory_space<vmem>>, vector<1024x512xf32>,
    return
  }
  func.func @transform_0(%arg0: i32) -> (i32, i32) {
    %c0_i32 = arith.constant 0 : i32
    %c0_i32_0 = arith.constant 0 : i32
    return %arg0, %c0_i32 : i32, i32
  }
  func.func @transform_1(%arg0: i32) -> (i32, i32) {
    %c0_i32 = arith.constant 0 : i32
    %c0_i32_0 = arith.constant 0 : i32
    %c0_i32_1 = arith.constant 0 : i32
    return %c0_i32, %c0_i32_0 : i32, i32
  }
  func.func @transform_2(%arg0: i32) -> (i32, i32) {
    %c0_i32 = arith.constant 0 : i32
    %c0_i32_0 = arith.constant 0 : i32
    %c0_i32_1 = arith.constant 0 : i32
    return %c0_i32, %c0_i32_0 : i32, i32
  }
  func.func @transform_3(%arg0: i32) -> (i32, i32) {
    %c0_i32 = arith.constant 0 : i32
    %c0_i32_0 = arith.constant 0 : i32
    return %arg0, %c0_i32 : i32, i32
  }
}

</mosaic_0001>

<llo_original>
// kernel: tpu_custom_call.1
$region0: #{tpu_custom_call.1}
  #allocation0 [shape = 'u32[]', space=smem, size = 0x4, offset = 0x4, fixed_abs, tag = 'smem constant byte address 0x4 - core index']
  #allocation1 [shape = 'u32[144,128]{1,0:T(1,128)}', space=vmem, size = 0x12000, scoped, tag = 'internal scratch']
  %s0 = inlined_call_operand.vmem [shape: f32[5000,1], index: 0, kind: input, shape index: {}]
  %s1 = inlined_call_operand.hbm [shape: f32[1,512], index: 1, kind: input, shape index: {}]
  %s2 = inlined_call_operand.hbm [shape: f32[1,512], index: 2, kind: input, shape index: {}]
  %s3 = inlined_call_operand.hbm [shape: f32[5000,512], index: 3, kind: output, shape index: {}]
  %s4 = sld [smem:[#allocation0]]
  $region53: #{tpu_custom_call.1} parent=0
    _
  %s6 = ssub.s32 1, %s4
  %s7 = scalar_select 0, %s6, %s4
  $region1: #{tpu_custom_call.1} parent=0
    #allocation2 [shape = 'u8[2048]{0}', space=vmem, size = 0x800, scoped, tag = 'input window, operand 1, single buffered']
    #allocation3 [shape = 's32[2]{0}', space=sflag, size = 0x8, scoped, tag = 'scoped memory for tpu_custom_call.1']
    #allocation4 [shape = 's32[2]{0}', space=sflag, size = 0x8, scoped, tag = 'scoped memory for tpu_custom_call.1']
    #allocation5 [shape = 'u8[2048]{0}', space=vmem, size = 0x800, scoped, tag = 'input window, operand 2, single buffered']
    #allocation6 [shape = 's32[1]{0}', space=sflag, size = 0x4, scoped, tag = 'scoped memory for tpu_custom_call.1']
    #allocation7 [shape = 'u8[4194304]{0}', space=vmem, size = 0x400000, scoped, tag = 'output window, operand 0']
    %8 = vsyncpa [#allocation3], 0
    %9 = vsyncpa [#allocation6], 0
    %10 = vsyncpa [#allocation4], 0
    %s11 = scalar_lea.sflag [#allocation4], 1
    %12 = vsyncpa %s11, 0
    loop: start=0, step=1, limit=7
    $region2: #{tpu_custom_call.1} parent=1 // loop_pre_header
      _
    $region3: #{tpu_custom_call.1} parent=1 // loop_header
      %s14 = sphi 0, %s18
      %p15 = scmp.ge.s32.totalorder %s14, 7
      %s24 = sphi 0, %s26
      %s27 = sphi 0, %s24
      %s28 = sphi 0, %s27
      %s44 = sphi 0, %s28
      %s48 = sphi 0, %s48
      %s50 = sphi 0, %s48
      %s51 = sphi 0, %s50
      %s65 = sphi 0, %s51
      %s69 = sphi 0, %s69
      %s71 = sphi 0, %s69
      %s72 = sphi 0, %s71
      %s86 = sphi 0, %s72
      %s92 = sphi 0, %s94
      %s95 = sphi 0, %s92
      %s96 = sphi 0, %s95
      %s112 = sphi 0, %s96
    $region4: #{tpu_custom_call.1} parent=1 // loop_header_branch
      %17 = sbr.rel (%p15) target = $region8
    $region5: #{tpu_custom_call.1} parent=1 // loop_body
      %s19 = ssub.s32 %s14, 1
      %s20 = ssub.s32 %s14, 2
      %s21 = sadd.s32 %s14, 1
      %s22 = ssub.s32 %s14, %s21
      %p23 = scmp.eq.s32.totalorder %s22, 0
      %s25 = sadd.s32 %s24, 1
      %s26 = scalar_select %p23, %s24, %s25
      %p29 = pneg %p23
      %p30 = scmp.eq.s32.totalorder %s14, 4
      %p31 = por %p29, %p30
      %p32 = scmp.ne.s32.totalorder %s24, %s27
      %p33 = scmp.eq.s32.totalorder %s14, 0
      %p34 = por %p32, %p33
      %p35 = scmp.ne.s32.totalorder %s24, %s27
      %p36 = scmp.eq.s32.totalorder %s19, 4
      %p37 = por %p35, %p36
      %p38 = scmp.ne.s32.totalorder %s27, %s28
      %p39 = scmp.eq.s32.totalorder %s19, 0
      %p40 = por %p38, %p39
      %p41 = scmp.ne.s32.totalorder %s27, %s28
      %p42 = scmp.eq.s32.totalorder %s20, 4
      %p43 = por %p41, %p42
      %p45 = scmp.ne.s32.totalorder %s28, %s44
      %p46 = scmp.eq.s32.totalorder %s20, 0
      %p47 = por %p45, %p46
      %s49 = sadd.s32 %s48, 1
      %p52 = scmp.eq.s32.totalorder %s14, 4
      %p53 = scmp.ne.s32.totalorder %s48, %s50
      %p54 = scmp.eq.s32.totalorder %s14, 0
      %p55 = por %p53, %p54
      %p56 = scmp.ne.s32.totalorder %s48, %s50
      %p57 = scmp.eq.s32.totalorder %s19, 4
      %p58 = por %p56, %p57
      %p59 = scmp.ne.s32.totalorder %s50, %s51
      %p60 = scmp.eq.s32.totalorder %s19, 0
      %p61 = por %p59, %p60
      %p62 = scmp.ne.s32.totalorder %s50, %s51
      %p63 = scmp.eq.s32.totalorder %s20, 4
      %p64 = por %p62, %p63
      %p66 = scmp.ne.s32.totalorder %s51, %s65
      %p67 = scmp.eq.s32.totalorder %s20, 0
      %p68 = por %p66, %p67
      %s70 = sadd.s32 %s69, 1
      %p73 = scmp.eq.s32.totalorder %s14, 4
      %p74 = scmp.ne.s32.totalorder %s69, %s71
      %p75 = scmp.eq.s32.totalorder %s14, 0
      %p76 = por %p74, %p75
      %p77 = scmp.ne.s32.totalorder %s69, %s71
      %p78 = scmp.eq.s32.totalorder %s19, 4
      %p79 = por %p77, %p78
      %p80 = scmp.ne.s32.totalorder %s71, %s72
      %p81 = scmp.eq.s32.totalorder %s19, 0
      %p82 = por %p80, %p81
      %p83 = scmp.ne.s32.totalorder %s71, %s72
      %p84 = scmp.eq.s32.totalorder %s20, 4
      %p85 = por %p83, %p84
      %p87 = scmp.ne.s32.totalorder %s72, %s86
      %p88 = scmp.eq.s32.totalorder %s20, 0
      %p89 = por %p87, %p88
      %s90 = ssub.s32 %s14, %s21
      %p91 = scmp.eq.s32.totalorder %s90, 0
      %s93 = sadd.s32 %s92, 1
      %s94 = scalar_select %p91, %s92, %s93
      %p97 = pneg %p91
      %p98 = scmp.eq.s32.totalorder %s14, 4
      %p99 = por %p97, %p98
      %p100 = scmp.ne.s32.totalorder %s92, %s95
      %p101 = scmp.eq.s32.totalorder %s14, 0
      %p102 = por %p100, %p101
      %p103 = scmp.ne.s32.totalorder %s92, %s95
      %p104 = scmp.eq.s32.totalorder %s19, 4
      %p105 = por %p103, %p104
      %p106 = scmp.ne.s32.totalorder %s95, %s96
      %p107 = scmp.eq.s32.totalorder %s19, 0
      %p108 = por %p106, %p107
      %p109 = scmp.ne.s32.totalorder %s95, %s96
      %p110 = scmp.eq.s32.totalorder %s20, 4
      %p111 = por %p109, %p110
      %p113 = scmp.ne.s32.totalorder %s96, %s112
      %p114 = scmp.eq.s32.totalorder %s20, 0
      %p115 = por %p113, %p114
      %p116 = scmp.le.s32.totalorder 1, %s14
      %p117 = scmp.lt.s32.totalorder %s14, 6
      %p118 = pnand %p116, %p117
      %p119 = pneg %p118
      // Predicated region
      $region9: #{tpu_custom_call.1} parent=5 // pred_check
        _
      $region10: #{tpu_custom_call.1} parent=5 // pred_check_branch
        %121 = sbr.rel (%p118) target = $region12
      $region11: #{tpu_custom_call.1} parent=5 // pred_region
        %s122 = ssub.s32 %s14, 1
        // Predicated region
        $region13: #{tpu_custom_call.1} parent=11 // pred_check
          %p123 = pneg %p61
        $region14: #{tpu_custom_call.1} parent=11 // pred_check_branch
          %125 = sbr.rel (%p123) target = $region16
        $region15: #{tpu_custom_call.1} parent=11 // pred_region
          %s127 = ssub.s32 64, 64
          %128 = vsyncadd [#allocation3], %s127
          %s130 = sshll.u32 [#allocation2], 4
          %s131 = int_to_ptr.vmem [resolvable:$true] %s130
          %133 = dma.hbm_to_vmem [thread:$0]  %s1, 64, %s131, [#allocation3]
        $region16: #{tpu_custom_call.1} parent=11 // pred_fallthru
          _
        // Predicated region
        $region17: #{tpu_custom_call.1} parent=11 // pred_check
          %p134 = pneg %p82
        $region18: #{tpu_custom_call.1} parent=11 // pred_check_branch
          %136 = sbr.rel (%p134) target = $region20
        $region19: #{tpu_custom_call.1} parent=11 // pred_region
          %s138 = ssub.s32 64, 64
          %139 = vsyncadd [#allocation6], %s138
          %s141 = sshll.u32 [#allocation5], 4
          %s142 = int_to_ptr.vmem [resolvable:$true] %s141
          %144 = dma.hbm_to_vmem [thread:$0]  %s2, 64, %s142, [#allocation6]
        $region20: #{tpu_custom_call.1} parent=11 // pred_fallthru
          _
      $region12: #{tpu_custom_call.1} parent=5 // pred_fallthru
        _
      %p145 = scmp.lt.s32.totalorder %s14, 5
      // Predicated region
      $region21: #{tpu_custom_call.1} parent=5 // pred_check
        %p146 = pneg %p145
      $region22: #{tpu_custom_call.1} parent=5 // pred_check_branch
        %148 = sbr.rel (%p146) target = $region24
      $region23: #{tpu_custom_call.1} parent=5 // pred_region
        // Predicated region
        $region25: #{tpu_custom_call.1} parent=23 // pred_check
          %p149 = pneg %p34
        $region26: #{tpu_custom_call.1} parent=23 // pred_check_branch
          %151 = sbr.rel (%p149) target = $region28
        $region27: #{tpu_custom_call.1} parent=23 // pred_region
          %s152 = smul.u32 128, %s14
          %s153 = ssub.s32 625, %s152
          %p154 = scmp.lt.s32.totalorder %s153, 128
          %s155 = scalar_select %p154, %s153, 128
          %s156 = smul.u32 128, %s155
          %p157 = scmp.lt.s32.totalorder %s152, 624
          %s158 = scalar_select %p157, %s152, 624
          %s159 = smul.addr %s158, 8
          %s160 = scalar_lea.vmem %s0, %s159
          %s161 = smul.u32 128, %s14
          %s162 = ssub.s32 625, %s161
          %p163 = scmp.lt.s32.totalorder %s162, 128
          %s164 = scalar_select %p163, %s162, 128
          %s165 = smul.u32 128, %s164
        $region28: #{tpu_custom_call.1} parent=23 // pred_fallthru
          _
      $region24: #{tpu_custom_call.1} parent=5 // pred_fallthru
        _
      %p166 = scmp.le.s32.totalorder 1, %s14
      %p167 = scmp.lt.s32.totalorder %s14, 6
      %p168 = pnand %p166, %p167
      %p169 = pneg %p168
      // Predicated region
      $region29: #{tpu_custom_call.1} parent=5 // pred_check
        _
      $region30: #{tpu_custom_call.1} parent=5 // pred_check_branch
        %171 = sbr.rel (%p168) target = $region32
      $region31: #{tpu_custom_call.1} parent=5 // pred_region
        %s172 = ssub.s32 %s14, 1
        // Predicated region
        $region33: #{tpu_custom_call.1} parent=31 // pred_check
          %p173 = pneg %p61
        $region34: #{tpu_custom_call.1} parent=31 // pred_check_branch
          %175 = sbr.rel (%p173) target = $region36
        $region35: #{tpu_custom_call.1} parent=31 // pred_region
          %176 = dma.done [#allocation3], 64
        $region36: #{tpu_custom_call.1} parent=31 // pred_fallthru
          _
        // Predicated region
        $region37: #{tpu_custom_call.1} parent=31 // pred_check
          %p177 = pneg %p82
        $region38: #{tpu_custom_call.1} parent=31 // pred_check_branch
          %179 = sbr.rel (%p177) target = $region40
        $region39: #{tpu_custom_call.1} parent=31 // pred_region
          %180 = dma.done [#allocation6], 64
        $region40: #{tpu_custom_call.1} parent=31 // pred_fallthru
          _
        %s181 = smul.u32 128, %s19
        %s182 = ssub.s32 625, %s181
        %p183 = scmp.lt.s32.totalorder %s182, 128
        %s184 = scalar_select %p183, %s182, 128
        %s185 = smul.u32 128, %s184
        %p186 = scmp.lt.s32.totalorder %s181, 624
        %s187 = scalar_select %p186, %s181, 624
        %s188 = smul.addr %s187, 8
        %s189 = scalar_lea.vmem %s0, %s188
        %p190 = pneg %p40
        %p191 = pneg %p37
        %p192 = pneg %p61
        %p193 = pneg %p58
        %p194 = pneg %p82
        %p195 = pneg %p79
        %p196 = pneg %p108
        %p197 = pneg %p105
        %s198 = sand.u32 %s95, 1
        %s199 = scalar_lea.sflag [#allocation4], %s198
        %s200 = sand.u32 %s95, 1
        %s201 = smul.addr %s200, 4096
        %s202 = scalar_lea.vmem [#allocation7], %s201
        %s203 = smul.u32 128, %s19
        %s204 = ssub.s32 625, %s203
        %p205 = scmp.lt.s32.totalorder %s204, 128
        %s206 = scalar_select %p205, %s204, 128
        %s207 = smul.u32 128, %s206
        %p208 = scmp.lt.s32.totalorder %s203, 624
        %s209 = scalar_select %p208, %s203, 624
        %s210 = smul.addr %s209, 8
        %s211 = scalar_lea.vmem %s0, %s210
        %s212 = smul.u32 128, %s19
        %s213 = ssub.s32 625, %s212
        %p214 = scmp.lt.s32.totalorder %s213, 128
        %s215 = scalar_select %p214, %s213, 128
        %s216 = smul.u32 128, %s215
        %s217 = smul.u32 128, %s19
        %s218 = ssub.s32 625, %s217
        %p219 = scmp.lt.s32.totalorder %s218, 128
        %s220 = scalar_select %p219, %s218, 128
        %s221 = smul.u32 128, %s220
        %s222 = smul.u32 %s221, 4
        %v223 = vld [vmem:[%s211] sm:$0xff]
        %v224 = vld [vmem:[%s211 + $0x8] sm:$0xff]
        %v225 = vld [vmem:[%s211 + $0x10] sm:$0xff]
        %v226 = vld [vmem:[%s211 + $0x18] sm:$0xff]
        %v227 = vld [vmem:[%s211 + $0x20] sm:$0xff]
        %v228 = vld [vmem:[%s211 + $0x28] sm:$0xff]
        %v229 = vld [vmem:[%s211 + $0x30] sm:$0xff]
        %v230 = vld [vmem:[%s211 + $0x38] sm:$0xff]
        %v231 = vld [vmem:[%s211 + $0x40] sm:$0xff]
        %v232 = vld [vmem:[%s211 + $0x48] sm:$0xff]
        %v233 = vld [vmem:[%s211 + $0x50] sm:$0xff]
        %v234 = vld [vmem:[%s211 + $0x58] sm:$0xff]
        %v235 = vld [vmem:[%s211 + $0x60] sm:$0xff]
        %v236 = vld [vmem:[%s211 + $0x68] sm:$0xff]
        %v237 = vld [vmem:[%s211 + $0x70] sm:$0xff]
        %v238 = vld [vmem:[%s211 + $0x78] sm:$0xff]
        %v239 = vld [vmem:[%s211 + $0x80] sm:$0xff]
        %v240 = vld [vmem:[%s211 + $0x88] sm:$0xff]
        %v241 = vld [vmem:[%s211 + $0x90] sm:$0xff]
        %v242 = vld [vmem:[%s211 + $0x98] sm:$0xff]
        %v243 = vld [vmem:[%s211 + $0xa0] sm:$0xff]
        %v244 = vld [vmem:[%s211 + $0xa8] sm:$0xff]
        %v245 = vld [vmem:[%s211 + $0xb0] sm:$0xff]
        %v246 = vld [vmem:[%s211 + $0xb8] sm:$0xff]
        %v247 = vld [vmem:[%s211 + $0xc0] sm:$0xff]
        %v248 = vld [vmem:[%s211 + $0xc8] sm:$0xff]
        %v249 = vld [vmem:[%s211 + $0xd0] sm:$0xff]
        %v250 = vld [vmem:[%s211 + $0xd8] sm:$0xff]
        %v251 = vld [vmem:[%s211 + $0xe0] sm:$0xff]
        %v252 = vld [vmem:[%s211 + $0xe8] sm:$0xff]
        %v253 = vld [vmem:[%s211 + $0xf0] sm:$0xff]
        %v254 = vld [vmem:[%s211 + $0xf8] sm:$0xff]
        %v255 = vld [vmem:[%s211 + $0x100] sm:$0xff]
        %v256 = vld [vmem:[%s211 + $0x108] sm:$0xff]
        %v257 = vld [vmem:[%s211 + $0x110] sm:$0xff]
        %v258 = vld [vmem:[%s211 + $0x118] sm:$0xff]
        %v259 = vld [vmem:[%s211 + $0x120] sm:$0xff]
        %v260 = vld [vmem:[%s211 + $0x128] sm:$0xff]
        %v261 = vld [vmem:[%s211 + $0x130] sm:$0xff]
        %v262 = vld [vmem:[%s211 + $0x138] sm:$0xff]
        %v263 = vld [vmem:[%s211 + $0x140] sm:$0xff]
        %v264 = vld [vmem:[%s211 + $0x148] sm:$0xff]
        %v265 = vld [vmem:[%s211 + $0x150] sm:$0xff]
        %v266 = vld [vmem:[%s211 + $0x158] sm:$0xff]
        %v267 = vld [vmem:[%s211 + $0x160] sm:$0xff]
        %v268 = vld [vmem:[%s211 + $0x168] sm:$0xff]
        %v269 = vld [vmem:[%s211 + $0x170] sm:$0xff]
        %v270 = vld [vmem:[%s211 + $0x178] sm:$0xff]
        %v271 = vld [vmem:[%s211 + $0x180] sm:$0xff]
        %v272 = vld [vmem:[%s211 + $0x188] sm:$0xff]
        %v273 = vld [vmem:[%s211 + $0x190] sm:$0xff]
        %v274 = vld [vmem:[%s211 + $0x198] sm:$0xff]
        %v275 = vld [vmem:[%s211 + $0x1a0] sm:$0xff]
        %v276 = vld [vmem:[%s211 + $0x1a8] sm:$0xff]
        %v277 = vld [vmem:[%s211 + $0x1b0] sm:$0xff]
        %v278 = vld [vmem:[%s211 + $0x1b8] sm:$0xff]
        %v279 = vld [vmem:[%s211 + $0x1c0] sm:$0xff]
        %v280 = vld [vmem:[%s211 + $0x1c8] sm:$0xff]
        %v281 = vld [vmem:[%s211 + $0x1d0] sm:$0xff]
        %v282 = vld [vmem:[%s211 + $0x1d8] sm:$0xff]
        %v283 = vld [vmem:[%s211 + $0x1e0] sm:$0xff]
        %v284 = vld [vmem:[%s211 + $0x1e8] sm:$0xff]
        %v285 = vld [vmem:[%s211 + $0x1f0] sm:$0xff]
        %v286 = vld [vmem:[%s211 + $0x1f8] sm:$0xff]
        %v287 = vld [vmem:[%s211 + $0x200] sm:$0xff]
        %v288 = vld [vmem:[%s211 + $0x208] sm:$0xff]
        %v289 = vld [vmem:[%s211 + $0x210] sm:$0xff]
        %v290 = vld [vmem:[%s211 + $0x218] sm:$0xff]
        %v291 = vld [vmem:[%s211 + $0x220] sm:$0xff]
        %v292 = vld [vmem:[%s211 + $0x228] sm:$0xff]
        %v293 = vld [vmem:[%s211 + $0x230] sm:$0xff]
        %v294 = vld [vmem:[%s211 + $0x238] sm:$0xff]
        %v295 = vld [vmem:[%s211 + $0x240] sm:$0xff]
        %v296 = vld [vmem:[%s211 + $0x248] sm:$0xff]
        %v297 = vld [vmem:[%s211 + $0x250] sm:$0xff]
        %v298 = vld [vmem:[%s211 + $0x258] sm:$0xff]
        %v299 = vld [vmem:[%s211 + $0x260] sm:$0xff]
        %v300 = vld [vmem:[%s211 + $0x268] sm:$0xff]
        %v301 = vld [vmem:[%s211 + $0x270] sm:$0xff]
        %v302 = vld [vmem:[%s211 + $0x278] sm:$0xff]
        %v303 = vld [vmem:[%s211 + $0x280] sm:$0xff]
        %v304 = vld [vmem:[%s211 + $0x288] sm:$0xff]
        %v305 = vld [vmem:[%s211 + $0x290] sm:$0xff]
        %v306 = vld [vmem:[%s211 + $0x298] sm:$0xff]
        %v307 = vld [vmem:[%s211 + $0x2a0] sm:$0xff]
        %v308 = vld [vmem:[%s211 + $0x2a8] sm:$0xff]
        %v309 = vld [vmem:[%s211 + $0x2b0] sm:$0xff]
        %v310 = vld [vmem:[%s211 + $0x2b8] sm:$0xff]
        %v311 = vld [vmem:[%s211 + $0x2c0] sm:$0xff]
        %v312 = vld [vmem:[%s211 + $0x2c8] sm:$0xff]
        %v313 = vld [vmem:[%s211 + $0x2d0] sm:$0xff]
        %v314 = vld [vmem:[%s211 + $0x2d8] sm:$0xff]
        %v315 = vld [vmem:[%s211 + $0x2e0] sm:$0xff]
        %v316 = vld [vmem:[%s211 + $0x2e8] sm:$0xff]
        %v317 = vld [vmem:[%s211 + $0x2f0] sm:$0xff]
        %v318 = vld [vmem:[%s211 + $0x2f8] sm:$0xff]
        %v319 = vld [vmem:[%s211 + $0x300] sm:$0xff]
        %v320 = vld [vmem:[%s211 + $0x308] sm:$0xff]
        %v321 = vld [vmem:[%s211 + $0x310] sm:$0xff]
        %v322 = vld [vmem:[%s211 + $0x318] sm:$0xff]
        %v323 = vld [vmem:[%s211 + $0x320] sm:$0xff]
        %v324 = vld [vmem:[%s211 + $0x328] sm:$0xff]
        %v325 = vld [vmem:[%s211 + $0x330] sm:$0xff]
        %v326 = vld [vmem:[%s211 + $0x338] sm:$0xff]
        %v327 = vld [vmem:[%s211 + $0x340] sm:$0xff]
        %v328 = vld [vmem:[%s211 + $0x348] sm:$0xff]
        %v329 = vld [vmem:[%s211 + $0x350] sm:$0xff]
        %v330 = vld [vmem:[%s211 + $0x358] sm:$0xff]
        %v331 = vld [vmem:[%s211 + $0x360] sm:$0xff]
        %v332 = vld [vmem:[%s211 + $0x368] sm:$0xff]
        %v333 = vld [vmem:[%s211 + $0x370] sm:$0xff]
        %v334 = vld [vmem:[%s211 + $0x378] sm:$0xff]
        %v335 = vld [vmem:[%s211 + $0x380] sm:$0xff]
        %v336 = vld [vmem:[%s211 + $0x388] sm:$0xff]
        %v337 = vld [vmem:[%s211 + $0x390] sm:$0xff]
        %v338 = vld [vmem:[%s211 + $0x398] sm:$0xff]
        %v339 = vld [vmem:[%s211 + $0x3a0] sm:$0xff]
        %v340 = vld [vmem:[%s211 + $0x3a8] sm:$0xff]
        %v341 = vld [vmem:[%s211 + $0x3b0] sm:$0xff]
        %v342 = vld [vmem:[%s211 + $0x3b8] sm:$0xff]
        %v343 = vld [vmem:[%s211 + $0x3c0] sm:$0xff]
        %v344 = vld [vmem:[%s211 + $0x3c8] sm:$0xff]
        %v345 = vld [vmem:[%s211 + $0x3d0] sm:$0xff]
        %v346 = vld [vmem:[%s211 + $0x3d8] sm:$0xff]
        %v347 = vld [vmem:[%s211 + $0x3e0] sm:$0xff]
        %v348 = vld [vmem:[%s211 + $0x3e8] sm:$0xff]
        %v349 = vld [vmem:[%s211 + $0x3f0] sm:$0xff]
        %v350 = vld [vmem:[%s211 + $0x3f8] sm:$0xff]
        %v351 = vld [vmem:[#allocation2] sm:$0xf]
        %353 = vset.pattern.permute.xlu0 0
        %354 = vperm.xlu0 %353, %v223
        %v355 = vpop.permute.xlu0 %354
        %358 = vset.pattern.permute.xlu0 0
        %359 = vperm.xlu0 %358, %v224
        %v360 = vpop.permute.xlu0 %359
        %363 = vset.pattern.permute.xlu0 0
        %364 = vperm.xlu0 %363, %v225
        %v365 = vpop.permute.xlu0 %364
        %368 = vset.pattern.permute.xlu0 0
        %369 = vperm.xlu0 %368, %v226
        %v370 = vpop.permute.xlu0 %369
        %373 = vset.pattern.permute.xlu0 0
        %374 = vperm.xlu0 %373, %v227
        %v375 = vpop.permute.xlu0 %374
        %378 = vset.pattern.permute.xlu0 0
        %379 = vperm.xlu0 %378, %v228
        %v380 = vpop.permute.xlu0 %379
        %383 = vset.pattern.permute.xlu0 0
        %384 = vperm.xlu0 %383, %v229
        %v385 = vpop.permute.xlu0 %384
        %388 = vset.pattern.permute.xlu0 0
        %389 = vperm.xlu0 %388, %v230
        %v390 = vpop.permute.xlu0 %389
        %393 = vset.pattern.permute.xlu0 0
        %394 = vperm.xlu0 %393, %v231
        %v395 = vpop.permute.xlu0 %394
        %398 = vset.pattern.permute.xlu0 0
        %399 = vperm.xlu0 %398, %v232
        %v400 = vpop.permute.xlu0 %399
        %403 = vset.pattern.permute.xlu0 0
        %404 = vperm.xlu0 %403, %v233
        %v405 = vpop.permute.xlu0 %404
        %408 = vset.pattern.permute.xlu0 0
        %409 = vperm.xlu0 %408, %v234
        %v410 = vpop.permute.xlu0 %409
        %413 = vset.pattern.permute.xlu0 0
        %414 = vperm.xlu0 %413, %v235
        %v415 = vpop.permute.xlu0 %414
        %418 = vset.pattern.permute.xlu0 0
        %419 = vperm.xlu0 %418, %v236
        %v420 = vpop.permute.xlu0 %419
        %423 = vset.pattern.permute.xlu0 0
        %424 = vperm.xlu0 %423, %v237
        %v425 = vpop.permute.xlu0 %424
        %428 = vset.pattern.permute.xlu0 0
        %429 = vperm.xlu0 %428, %v238
        %v430 = vpop.permute.xlu0 %429
        %433 = vset.pattern.permute.xlu0 0
        %434 = vperm.xlu0 %433, %v239
        %v435 = vpop.permute.xlu0 %434
        %438 = vset.pattern.permute.xlu0 0
        %439 = vperm.xlu0 %438, %v240
        %v440 = vpop.permute.xlu0 %439
        %443 = vset.pattern.permute.xlu0 0
        %444 = vperm.xlu0 %443, %v241
        %v445 = vpop.permute.xlu0 %444
        %448 = vset.pattern.permute.xlu0 0
        %449 = vperm.xlu0 %448, %v242
        %v450 = vpop.permute.xlu0 %449
        %453 = vset.pattern.permute.xlu0 0
        %454 = vperm.xlu0 %453, %v243
        %v455 = vpop.permute.xlu0 %454
        %458 = vset.pattern.permute.xlu0 0
        %459 = vperm.xlu0 %458, %v244
        %v460 = vpop.permute.xlu0 %459
        %463 = vset.pattern.permute.xlu0 0
        %464 = vperm.xlu0 %463, %v245
        %v465 = vpop.permute.xlu0 %464
        %468 = vset.pattern.permute.xlu0 0
        %469 = vperm.xlu0 %468, %v246
        %v470 = vpop.permute.xlu0 %469
        %473 = vset.pattern.permute.xlu0 0
        %474 = vperm.xlu0 %473, %v247
        %v475 = vpop.permute.xlu0 %474
        %478 = vset.pattern.permute.xlu0 0
        %479 = vperm.xlu0 %478, %v248
        %v480 = vpop.permute.xlu0 %479
        %483 = vset.pattern.permute.xlu0 0
        %484 = vperm.xlu0 %483, %v249
        %v485 = vpop.permute.xlu0 %484
        %488 = vset.pattern.permute.xlu0 0
        %489 = vperm.xlu0 %488, %v250
        %v490 = vpop.permute.xlu0 %489
        %493 = vset.pattern.permute.xlu0 0
        %494 = vperm.xlu0 %493, %v251
        %v495 = vpop.permute.xlu0 %494
        %498 = vset.pattern.permute.xlu0 0
        %499 = vperm.xlu0 %498, %v252
        %v500 = vpop.permute.xlu0 %499
        %503 = vset.pattern.permute.xlu0 0
        %504 = vperm.xlu0 %503, %v253
        %v505 = vpop.permute.xlu0 %504
        %508 = vset.pattern.permute.xlu0 0
        %509 = vperm.xlu0 %508, %v254
        %v510 = vpop.permute.xlu0 %509
        %513 = vset.pattern.permute.xlu0 0
        %514 = vperm.xlu0 %513, %v255
        %v515 = vpop.permute.xlu0 %514
        %518 = vset.pattern.permute.xlu0 0
        %519 = vperm.xlu0 %518, %v256
        %v520 = vpop.permute.xlu0 %519
        %523 = vset.pattern.permute.xlu0 0
        %524 = vperm.xlu0 %523, %v257
        %v525 = vpop.permute.xlu0 %524
        %528 = vset.pattern.permute.xlu0 0
        %529 = vperm.xlu0 %528, %v258
        %v530 = vpop.permute.xlu0 %529
        %533 = vset.pattern.permute.xlu0 0
        %534 = vperm.xlu0 %533, %v259
        %v535 = vpop.permute.xlu0 %534
        %538 = vset.pattern.permute.xlu0 0
        %539 = vperm.xlu0 %538, %v260
        %v540 = vpop.permute.xlu0 %539
        %543 = vset.pattern.permute.xlu0 0
        %544 = vperm.xlu0 %543, %v261
        %v545 = vpop.permute.xlu0 %544
        %548 = vset.pattern.permute.xlu0 0
        %549 = vperm.xlu0 %548, %v262
        %v550 = vpop.permute.xlu0 %549
        %553 = vset.pattern.permute.xlu0 0
        %554 = vperm.xlu0 %553, %v263
        %v555 = vpop.permute.xlu0 %554
        %558 = vset.pattern.permute.xlu0 0
        %559 = vperm.xlu0 %558, %v264
        %v560 = vpop.permute.xlu0 %559
        %563 = vset.pattern.permute.xlu0 0
        %564 = vperm.xlu0 %563, %v265
        %v565 = vpop.permute.xlu0 %564
        %568 = vset.pattern.permute.xlu0 0
        %569 = vperm.xlu0 %568, %v266
        %v570 = vpop.permute.xlu0 %569
        %573 = vset.pattern.permute.xlu0 0
        %574 = vperm.xlu0 %573, %v267
        %v575 = vpop.permute.xlu0 %574
        %578 = vset.pattern.permute.xlu0 0
        %579 = vperm.xlu0 %578, %v268
        %v580 = vpop.permute.xlu0 %579
        %583 = vset.pattern.permute.xlu0 0
        %584 = vperm.xlu0 %583, %v269
        %v585 = vpop.permute.xlu0 %584
        %588 = vset.pattern.permute.xlu0 0
        %589 = vperm.xlu0 %588, %v270
        %v590 = vpop.permute.xlu0 %589
        %593 = vset.pattern.permute.xlu0 0
        %594 = vperm.xlu0 %593, %v271
        %v595 = vpop.permute.xlu0 %594
        %598 = vset.pattern.permute.xlu0 0
        %599 = vperm.xlu0 %598, %v272
        %v600 = vpop.permute.xlu0 %599
        %603 = vset.pattern.permute.xlu0 0
        %604 = vperm.xlu0 %603, %v273
        %v605 = vpop.permute.xlu0 %604
        %608 = vset.pattern.permute.xlu0 0
        %609 = vperm.xlu0 %608, %v274
        %v610 = vpop.permute.xlu0 %609
        %613 = vset.pattern.permute.xlu0 0
        %614 = vperm.xlu0 %613, %v275
        %v615 = vpop.permute.xlu0 %614
        %618 = vset.pattern.permute.xlu0 0
        %619 = vperm.xlu0 %618, %v276
        %v620 = vpop.permute.xlu0 %619
        %623 = vset.pattern.permute.xlu0 0
        %624 = vperm.xlu0 %623, %v277
        %v625 = vpop.permute.xlu0 %624
        %628 = vset.pattern.permute.xlu0 0
        %629 = vperm.xlu0 %628, %v278
        %v630 = vpop.permute.xlu0 %629
        %633 = vset.pattern.permute.xlu0 0
        %634 = vperm.xlu0 %633, %v279
        %v635 = vpop.permute.xlu0 %634
        %638 = vset.pattern.permute.xlu0 0
        %639 = vperm.xlu0 %638, %v280
        %v640 = vpop.permute.xlu0 %639
        %643 = vset.pattern.permute.xlu0 0
        %644 = vperm.xlu0 %643, %v281
        %v645 = vpop.permute.xlu0 %644
        %648 = vset.pattern.permute.xlu0 0
        %649 = vperm.xlu0 %648, %v282
        %v650 = vpop.permute.xlu0 %649
        %653 = vset.pattern.permute.xlu0 0
        %654 = vperm.xlu0 %653, %v283
        %v655 = vpop.permute.xlu0 %654
        %658 = vset.pattern.permute.xlu0 0
        %659 = vperm.xlu0 %658, %v284
        %v660 = vpop.permute.xlu0 %659
        %663 = vset.pattern.permute.xlu0 0
        %664 = vperm.xlu0 %663, %v285
        %v665 = vpop.permute.xlu0 %664
        %668 = vset.pattern.permute.xlu0 0
        %669 = vperm.xlu0 %668, %v286
        %v670 = vpop.permute.xlu0 %669
        %673 = vset.pattern.permute.xlu0 0
        %674 = vperm.xlu0 %673, %v287
        %v675 = vpop.permute.xlu0 %674
        %678 = vset.pattern.permute.xlu0 0
        %679 = vperm.xlu0 %678, %v288
        %v680 = vpop.permute.xlu0 %679
        %683 = vset.pattern.permute.xlu0 0
        %684 = vperm.xlu0 %683, %v289
        %v685 = vpop.permute.xlu0 %684
        %688 = vset.pattern.permute.xlu0 0
        %689 = vperm.xlu0 %688, %v290
        %v690 = vpop.permute.xlu0 %689
        %693 = vset.pattern.permute.xlu0 0
        %694 = vperm.xlu0 %693, %v291
        %v695 = vpop.permute.xlu0 %694
        %698 = vset.pattern.permute.xlu0 0
        %699 = vperm.xlu0 %698, %v292
        %v700 = vpop.permute.xlu0 %699
        %703 = vset.pattern.permute.xlu0 0
        %704 = vperm.xlu0 %703, %v293
        %v705 = vpop.permute.xlu0 %704
        %708 = vset.pattern.permute.xlu0 0
        %709 = vperm.xlu0 %708, %v294
        %v710 = vpop.permute.xlu0 %709
        %713 = vset.pattern.permute.xlu0 0
        %714 = vperm.xlu0 %713, %v295
        %v715 = vpop.permute.xlu0 %714
        %718 = vset.pattern.permute.xlu0 0
        %719 = vperm.xlu0 %718, %v296
        %v720 = vpop.permute.xlu0 %719
        %723 = vset.pattern.permute.xlu0 0
        %724 = vperm.xlu0 %723, %v297
        %v725 = vpop.permute.xlu0 %724
        %728 = vset.pattern.permute.xlu0 0
        %729 = vperm.xlu0 %728, %v298
        %v730 = vpop.permute.xlu0 %729
        %733 = vset.pattern.permute.xlu0 0
        %734 = vperm.xlu0 %733, %v299
        %v735 = vpop.permute.xlu0 %734
        %738 = vset.pattern.permute.xlu0 0
        %739 = vperm.xlu0 %738, %v300
        %v740 = vpop.permute.xlu0 %739
        %743 = vset.pattern.permute.xlu0 0
        %744 = vperm.xlu0 %743, %v301
        %v745 = vpop.permute.xlu0 %744
        %748 = vset.pattern.permute.xlu0 0
        %749 = vperm.xlu0 %748, %v302
        %v750 = vpop.permute.xlu0 %749
        %753 = vset.pattern.permute.xlu0 0
        %754 = vperm.xlu0 %753, %v303
        %v755 = vpop.permute.xlu0 %754
        %758 = vset.pattern.permute.xlu0 0
        %759 = vperm.xlu0 %758, %v304
        %v760 = vpop.permute.xlu0 %759
        %763 = vset.pattern.permute.xlu0 0
        %764 = vperm.xlu0 %763, %v305
        %v765 = vpop.permute.xlu0 %764
        %768 = vset.pattern.permute.xlu0 0
        %769 = vperm.xlu0 %768, %v306
        %v770 = vpop.permute.xlu0 %769
        %773 = vset.pattern.permute.xlu0 0
        %774 = vperm.xlu0 %773, %v307
        %v775 = vpop.permute.xlu0 %774
        %778 = vset.pattern.permute.xlu0 0
        %779 = vperm.xlu0 %778, %v308
        %v780 = vpop.permute.xlu0 %779
        %783 = vset.pattern.permute.xlu0 0
        %784 = vperm.xlu0 %783, %v309
        %v785 = vpop.permute.xlu0 %784
        %788 = vset.pattern.permute.xlu0 0
        %789 = vperm.xlu0 %788, %v310
        %v790 = vpop.permute.xlu0 %789
        %793 = vset.pattern.permute.xlu0 0
        %794 = vperm.xlu0 %793, %v311
        %v795 = vpop.permute.xlu0 %794
        %798 = vset.pattern.permute.xlu0 0
        %799 = vperm.xlu0 %798, %v312
        %v800 = vpop.permute.xlu0 %799
        %803 = vset.pattern.permute.xlu0 0
        %804 = vperm.xlu0 %803, %v313
        %v805 = vpop.permute.xlu0 %804
        %808 = vset.pattern.permute.xlu0 0
        %809 = vperm.xlu0 %808, %v314
        %v810 = vpop.permute.xlu0 %809
        %813 = vset.pattern.permute.xlu0 0
        %814 = vperm.xlu0 %813, %v315
        %v815 = vpop.permute.xlu0 %814
        %818 = vset.pattern.permute.xlu0 0
        %819 = vperm.xlu0 %818, %v316
        %v820 = vpop.permute.xlu0 %819
        %823 = vset.pattern.permute.xlu0 0
        %824 = vperm.xlu0 %823, %v317
        %v825 = vpop.permute.xlu0 %824
        %828 = vset.pattern.permute.xlu0 0
        %829 = vperm.xlu0 %828, %v318
        %v830 = vpop.permute.xlu0 %829
        %833 = vset.pattern.permute.xlu0 0
        %834 = vperm.xlu0 %833, %v319
        %v835 = vpop.permute.xlu0 %834
        %838 = vset.pattern.permute.xlu0 0
        %839 = vperm.xlu0 %838, %v320
        %v840 = vpop.permute.xlu0 %839
        %843 = vset.pattern.permute.xlu0 0
        %844 = vperm.xlu0 %843, %v321
        %v845 = vpop.permute.xlu0 %844
        %848 = vset.pattern.permute.xlu0 0
        %849 = vperm.xlu0 %848, %v322
        %v850 = vpop.permute.xlu0 %849
        %853 = vset.pattern.permute.xlu0 0
        %854 = vperm.xlu0 %853, %v323
        %v855 = vpop.permute.xlu0 %854
        %858 = vset.pattern.permute.xlu0 0
        %859 = vperm.xlu0 %858, %v324
        %v860 = vpop.permute.xlu0 %859
        %863 = vset.pattern.permute.xlu0 0
        %864 = vperm.xlu0 %863, %v325
        %v865 = vpop.permute.xlu0 %864
        %868 = vset.pattern.permute.xlu0 0
        %869 = vperm.xlu0 %868, %v326
        %v870 = vpop.permute.xlu0 %869
        %873 = vset.pattern.permute.xlu0 0
        %874 = vperm.xlu0 %873, %v327
        %v875 = vpop.permute.xlu0 %874
        %878 = vset.pattern.permute.xlu0 0
        %879 = vperm.xlu0 %878, %v328
        %v880 = vpop.permute.xlu0 %879
        %883 = vset.pattern.permute.xlu0 0
        %884 = vperm.xlu0 %883, %v329
        %v885 = vpop.permute.xlu0 %884
        %888 = vset.pattern.permute.xlu0 0
        %889 = vperm.xlu0 %888, %v330
        %v890 = vpop.permute.xlu0 %889
        %893 = vset.pattern.permute.xlu0 0
        %894 = vperm.xlu0 %893, %v331
        %v895 = vpop.permute.xlu0 %894
        %898 = vset.pattern.permute.xlu0 0
        %899 = vperm.xlu0 %898, %v332
        %v900 = vpop.permute.xlu0 %899
        %903 = vset.pattern.permute.xlu0 0
        %904 = vperm.xlu0 %903, %v333
        %v905 = vpop.permute.xlu0 %904
        %908 = vset.pattern.permute.xlu0 0
        %909 = vperm.xlu0 %908, %v334
        %v910 = vpop.permute.xlu0 %909
        %913 = vset.pattern.permute.xlu0 0
        %914 = vperm.xlu0 %913, %v335
        %v915 = vpop.permute.xlu0 %914
        %918 = vset.pattern.permute.xlu0 0
        %919 = vperm.xlu0 %918, %v336
        %v920 = vpop.permute.xlu0 %919
        %923 = vset.pattern.permute.xlu0 0
        %924 = vperm.xlu0 %923, %v337
        %v925 = vpop.permute.xlu0 %924
        %928 = vset.pattern.permute.xlu0 0
        %929 = vperm.xlu0 %928, %v338
        %v930 = vpop.permute.xlu0 %929
        %933 = vset.pattern.permute.xlu0 0
        %934 = vperm.xlu0 %933, %v339
        %v935 = vpop.permute.xlu0 %934
        %938 = vset.pattern.permute.xlu0 0
        %939 = vperm.xlu0 %938, %v340
        %v940 = vpop.permute.xlu0 %939
        %943 = vset.pattern.permute.xlu0 0
        %944 = vperm.xlu0 %943, %v341
        %v945 = vpop.permute.xlu0 %944
        %948 = vset.pattern.permute.xlu0 0
        %949 = vperm.xlu0 %948, %v342
        %v950 = vpop.permute.xlu0 %949
        %953 = vset.pattern.permute.xlu0 0
        %954 = vperm.xlu0 %953, %v343
        %v955 = vpop.permute.xlu0 %954
        %958 = vset.pattern.permute.xlu0 0
        %959 = vperm.xlu0 %958, %v344
        %v960 = vpop.permute.xlu0 %959
        %963 = vset.pattern.permute.xlu0 0
        %964 = vperm.xlu0 %963, %v345
        %v965 = vpop.permute.xlu0 %964
        %968 = vset.pattern.permute.xlu0 0
        %969 = vperm.xlu0 %968, %v346
        %v970 = vpop.permute.xlu0 %969
        %973 = vset.pattern.permute.xlu0 0
        %974 = vperm.xlu0 %973, %v347
        %v975 = vpop.permute.xlu0 %974
        %978 = vset.pattern.permute.xlu0 0
        %979 = vperm.xlu0 %978, %v348
        %v980 = vpop.permute.xlu0 %979
        %983 = vset.pattern.permute.xlu0 0
        %984 = vperm.xlu0 %983, %v349
        %v985 = vpop.permute.xlu0 %984
        %988 = vset.pattern.permute.xlu0 0
        %989 = vperm.xlu0 %988, %v350
        %v990 = vpop.permute.xlu0 %989
        %v993 = vlaneseq
        %v994 = vshrl.u32 %v993, 7
        %v995 = vsub.s32 0, %v994
        %v996 = vrot.slane %v351, %v995
        %v997 = vlaneseq
        %v998 = vshrl.u32 %v997, 7
        %v999 = vsub.s32 1, %v998
        %v1000 = vrot.slane %v351, %v999
        %v1001 = vlaneseq
        %v1002 = vshrl.u32 %v1001, 7
        %v1003 = vsub.s32 2, %v1002
        %v1004 = vrot.slane %v351, %v1003
        %v1005 = vlaneseq
        %v1006 = vshrl.u32 %v1005, 7
        %v1007 = vsub.s32 3, %v1006
        %v1008 = vrot.slane %v351, %v1007
        %v1013 = vmul.f32 %v355, %v996
        %v1014 = vmul.f32 %v355, %v1000
        %v1015 = vmul.f32 %v355, %v1004
        %v1016 = vmul.f32 %v355, %v1008
        %v1017 = vmul.f32 %v360, %v996
        %v1018 = vmul.f32 %v360, %v1000
        %v1019 = vmul.f32 %v360, %v1004
        %v1020 = vmul.f32 %v360, %v1008
        %v1021 = vmul.f32 %v365, %v996
        %v1022 = vmul.f32 %v365, %v1000
        %v1023 = vmul.f32 %v365, %v1004
        %v1024 = vmul.f32 %v365, %v1008
        %v1025 = vmul.f32 %v370, %v996
        %v1026 = vmul.f32 %v370, %v1000
        %v1027 = vmul.f32 %v370, %v1004
        %v1028 = vmul.f32 %v370, %v1008
        %v1029 = vmul.f32 %v375, %v996
        %v1030 = vmul.f32 %v375, %v1000
        %v1031 = vmul.f32 %v375, %v1004
        %v1032 = vmul.f32 %v375, %v1008
        %v1033 = vmul.f32 %v380, %v996
        %v1034 = vmul.f32 %v380, %v1000
        %v1035 = vmul.f32 %v380, %v1004
        %v1036 = vmul.f32 %v380, %v1008
        %v1037 = vmul.f32 %v385, %v996
        %v1038 = vmul.f32 %v385, %v1000
        %v1039 = vmul.f32 %v385, %v1004
        %v1040 = vmul.f32 %v385, %v1008
        %v1041 = vmul.f32 %v390, %v996
        %v1042 = vmul.f32 %v390, %v1000
        %v1043 = vmul.f32 %v390, %v1004
        %v1044 = vmul.f32 %v390, %v1008
        %v1045 = vmul.f32 %v395, %v996
        %v1046 = vmul.f32 %v395, %v1000
        %v1047 = vmul.f32 %v395, %v1004
        %v1048 = vmul.f32 %v395, %v1008
        %v1049 = vmul.f32 %v400, %v996
        %v1050 = vmul.f32 %v400, %v1000
        %v1051 = vmul.f32 %v400, %v1004
        %v1052 = vmul.f32 %v400, %v1008
        %v1053 = vmul.f32 %v405, %v996
        %v1054 = vmul.f32 %v405, %v1000
        %v1055 = vmul.f32 %v405, %v1004
        %v1056 = vmul.f32 %v405, %v1008
        %v1057 = vmul.f32 %v410, %v996
        %v1058 = vmul.f32 %v410, %v1000
        %v1059 = vmul.f32 %v410, %v1004
        %v1060 = vmul.f32 %v410, %v1008
        %v1061 = vmul.f32 %v415, %v996
        %v1062 = vmul.f32 %v415, %v1000
        %v1063 = vmul.f32 %v415, %v1004
        %v1064 = vmul.f32 %v415, %v1008
        %v1065 = vmul.f32 %v420, %v996
        %v1066 = vmul.f32 %v420, %v1000
        %v1067 = vmul.f32 %v420, %v1004
        %v1068 = vmul.f32 %v420, %v1008
        %v1069 = vmul.f32 %v425, %v996
        %v1070 = vmul.f32 %v425, %v1000
        %v1071 = vmul.f32 %v425, %v1004
        %v1072 = vmul.f32 %v425, %v1008
        %v1073 = vmul.f32 %v430, %v996
        %v1074 = vmul.f32 %v430, %v1000
        %v1075 = vmul.f32 %v430, %v1004
        %v1076 = vmul.f32 %v430, %v1008
        %v1077 = vmul.f32 %v435, %v996
        %v1078 = vmul.f32 %v435, %v1000
        %v1079 = vmul.f32 %v435, %v1004
        %v1080 = vmul.f32 %v435, %v1008
        %v1081 = vmul.f32 %v440, %v996
        %v1082 = vmul.f32 %v440, %v1000
        %v1083 = vmul.f32 %v440, %v1004
        %v1084 = vmul.f32 %v440, %v1008
        %v1085 = vmul.f32 %v445, %v996
        %v1086 = vmul.f32 %v445, %v1000
        %v1087 = vmul.f32 %v445, %v1004
        %v1088 = vmul.f32 %v445, %v1008
        %v1089 = vmul.f32 %v450, %v996
        %v1090 = vmul.f32 %v450, %v1000
        %v1091 = vmul.f32 %v450, %v1004
        %v1092 = vmul.f32 %v450, %v1008
        %v1093 = vmul.f32 %v455, %v996
        %v1094 = vmul.f32 %v455, %v1000
        %v1095 = vmul.f32 %v455, %v1004
        %v1096 = vmul.f32 %v455, %v1008
        %v1097 = vmul.f32 %v460, %v996
        %v1098 = vmul.f32 %v460, %v1000
        %v1099 = vmul.f32 %v460, %v1004
        %v1100 = vmul.f32 %v460, %v1008
        %v1101 = vmul.f32 %v465, %v996
        %v1102 = vmul.f32 %v465, %v1000
        %v1103 = vmul.f32 %v465, %v1004
        %v1104 = vmul.f32 %v465, %v1008
        %v1105 = vmul.f32 %v470, %v996
        %v1106 = vmul.f32 %v470, %v1000
        %v1107 = vmul.f32 %v470, %v1004
        %v1108 = vmul.f32 %v470, %v1008
        %v1109 = vmul.f32 %v475, %v996
        %v1110 = vmul.f32 %v475, %v1000
        %v1111 = vmul.f32 %v475, %v1004
        %v1112 = vmul.f32 %v475, %v1008
        %v1113 = vmul.f32 %v480, %v996
        %v1114 = vmul.f32 %v480, %v1000
        %v1115 = vmul.f32 %v480, %v1004
        %v1116 = vmul.f32 %v480, %v1008
        %v1117 = vmul.f32 %v485, %v996
        %v1118 = vmul.f32 %v485, %v1000
        %v1119 = vmul.f32 %v485, %v1004
        %v1120 = vmul.f32 %v485, %v1008
        %v1121 = vmul.f32 %v490, %v996
        %v1122 = vmul.f32 %v490, %v1000
        %v1123 = vmul.f32 %v490, %v1004
        %v1124 = vmul.f32 %v490, %v1008
        %v1125 = vmul.f32 %v495, %v996
        %v1126 = vmul.f32 %v495, %v1000
        %v1127 = vmul.f32 %v495, %v1004
        %v1128 = vmul.f32 %v495, %v1008
        %v1129 = vmul.f32 %v500, %v996
        %v1130 = vmul.f32 %v500, %v1000
        %v1131 = vmul.f32 %v500, %v1004
        %v1132 = vmul.f32 %v500, %v1008
        %v1133 = vmul.f32 %v505, %v996
        %v1134 = vmul.f32 %v505, %v1000
        %v1135 = vmul.f32 %v505, %v1004
        %v1136 = vmul.f32 %v505, %v1008
        %v1137 = vmul.f32 %v510, %v996
        %v1138 = vmul.f32 %v510, %v1000
        %v1139 = vmul.f32 %v510, %v1004
        %v1140 = vmul.f32 %v510, %v1008
        %v1141 = vmul.f32 %v515, %v996
        %v1142 = vmul.f32 %v515, %v1000
        %v1143 = vmul.f32 %v515, %v1004
        %v1144 = vmul.f32 %v515, %v1008
        %v1145 = vmul.f32 %v520, %v996
        %v1146 = vmul.f32 %v520, %v1000
        %v1147 = vmul.f32 %v520, %v1004
        %v1148 = vmul.f32 %v520, %v1008
        %v1149 = vmul.f32 %v525, %v996
        %v1150 = vmul.f32 %v525, %v1000
        %v1151 = vmul.f32 %v525, %v1004
        %v1152 = vmul.f32 %v525, %v1008
        %v1153 = vmul.f32 %v530, %v996
        %v1154 = vmul.f32 %v530, %v1000
        %v1155 = vmul.f32 %v530, %v1004
        %v1156 = vmul.f32 %v530, %v1008
        %v1157 = vmul.f32 %v535, %v996
        %v1158 = vmul.f32 %v535, %v1000
        %v1159 = vmul.f32 %v535, %v1004
        %v1160 = vmul.f32 %v535, %v1008
        %v1161 = vmul.f32 %v540, %v996
        %v1162 = vmul.f32 %v540, %v1000
        %v1163 = vmul.f32 %v540, %v1004
        %v1164 = vmul.f32 %v540, %v1008
        %v1165 = vmul.f32 %v545, %v996
        %v1166 = vmul.f32 %v545, %v1000
        %v1167 = vmul.f32 %v545, %v1004
        %v1168 = vmul.f32 %v545, %v1008
        %v1169 = vmul.f32 %v550, %v996
        %v1170 = vmul.f32 %v550, %v1000
        %v1171 = vmul.f32 %v550, %v1004
        %v1172 = vmul.f32 %v550, %v1008
        %v1173 = vmul.f32 %v555, %v996
        %v1174 = vmul.f32 %v555, %v1000
        %v1175 = vmul.f32 %v555, %v1004
        %v1176 = vmul.f32 %v555, %v1008
        %v1177 = vmul.f32 %v560, %v996
        %v1178 = vmul.f32 %v560, %v1000
        %v1179 = vmul.f32 %v560, %v1004
        %v1180 = vmul.f32 %v560, %v1008
        %v1181 = vmul.f32 %v565, %v996
        %v1182 = vmul.f32 %v565, %v1000
        %v1183 = vmul.f32 %v565, %v1004
        %v1184 = vmul.f32 %v565, %v1008
        %v1185 = vmul.f32 %v570, %v996
        %v1186 = vmul.f32 %v570, %v1000
        %v1187 = vmul.f32 %v570, %v1004
        %v1188 = vmul.f32 %v570, %v1008
        %v1189 = vmul.f32 %v575, %v996
        %v1190 = vmul.f32 %v575, %v1000
        %v1191 = vmul.f32 %v575, %v1004
        %v1192 = vmul.f32 %v575, %v1008
        %v1193 = vmul.f32 %v580, %v996
        %v1194 = vmul.f32 %v580, %v1000
        %v1195 = vmul.f32 %v580, %v1004
        %v1196 = vmul.f32 %v580, %v1008
        %v1197 = vmul.f32 %v585, %v996
        %v1198 = vmul.f32 %v585, %v1000
        %v1199 = vmul.f32 %v585, %v1004
        %v1200 = vmul.f32 %v585, %v1008
        %v1201 = vmul.f32 %v590, %v996
        %v1202 = vmul.f32 %v590, %v1000
        %v1203 = vmul.f32 %v590, %v1004
        %v1204 = vmul.f32 %v590, %v1008
        %v1205 = vmul.f32 %v595, %v996
        %v1206 = vmul.f32 %v595, %v1000
        %v1207 = vmul.f32 %v595, %v1004
        %v1208 = vmul.f32 %v595, %v1008
        %v1209 = vmul.f32 %v600, %v996
        %v1210 = vmul.f32 %v600, %v1000
        %v1211 = vmul.f32 %v600, %v1004
        %v1212 = vmul.f32 %v600, %v1008
        %v1213 = vmul.f32 %v605, %v996
        %v1214 = vmul.f32 %v605, %v1000
        %v1215 = vmul.f32 %v605, %v1004
        %v1216 = vmul.f32 %v605, %v1008
        %v1217 = vmul.f32 %v610, %v996
        %v1218 = vmul.f32 %v610, %v1000
        %v1219 = vmul.f32 %v610, %v1004
        %v1220 = vmul.f32 %v610, %v1008
        %v1221 = vmul.f32 %v615, %v996
        %v1222 = vmul.f32 %v615, %v1000
        %v1223 = vmul.f32 %v615, %v1004
        %v1224 = vmul.f32 %v615, %v1008
        %v1225 = vmul.f32 %v620, %v996
        %v1226 = vmul.f32 %v620, %v1000
        %v1227 = vmul.f32 %v620, %v1004
        %v1228 = vmul.f32 %v620, %v1008
        %v1229 = vmul.f32 %v625, %v996
        %v1230 = vmul.f32 %v625, %v1000
        %v1231 = vmul.f32 %v625, %v1004
        %v1232 = vmul.f32 %v625, %v1008
        %v1233 = vmul.f32 %v630, %v996
        %v1234 = vmul.f32 %v630, %v1000
        %v1235 = vmul.f32 %v630, %v1004
        %v1236 = vmul.f32 %v630, %v1008
        %v1237 = vmul.f32 %v635, %v996
        %v1238 = vmul.f32 %v635, %v1000
        %v1239 = vmul.f32 %v635, %v1004
        %v1240 = vmul.f32 %v635, %v1008
        %v1241 = vmul.f32 %v640, %v996
        %v1242 = vmul.f32 %v640, %v1000
        %v1243 = vmul.f32 %v640, %v1004
        %v1244 = vmul.f32 %v640, %v1008
        %v1245 = vmul.f32 %v645, %v996
        %v1246 = vmul.f32 %v645, %v1000
        %v1247 = vmul.f32 %v645, %v1004
        %v1248 = vmul.f32 %v645, %v1008
        %v1249 = vmul.f32 %v650, %v996
        %v1250 = vmul.f32 %v650, %v1000
        %v1251 = vmul.f32 %v650, %v1004
        %v1252 = vmul.f32 %v650, %v1008
        %v1253 = vmul.f32 %v655, %v996
        %v1254 = vmul.f32 %v655, %v1000
        %v1255 = vmul.f32 %v655, %v1004
        %v1256 = vmul.f32 %v655, %v1008
        %v1257 = vmul.f32 %v660, %v996
        %v1258 = vmul.f32 %v660, %v1000
        %v1259 = vmul.f32 %v660, %v1004
        %v1260 = vmul.f32 %v660, %v1008
        %v1261 = vmul.f32 %v665, %v996
        %v1262 = vmul.f32 %v665, %v1000
        %v1263 = vmul.f32 %v665, %v1004
        %v1264 = vmul.f32 %v665, %v1008
        %v1265 = vmul.f32 %v670, %v996
        %v1266 = vmul.f32 %v670, %v1000
        %v1267 = vmul.f32 %v670, %v1004
        %v1268 = vmul.f32 %v670, %v1008
        %v1269 = vmul.f32 %v675, %v996
        %v1270 = vmul.f32 %v675, %v1000
        %v1271 = vmul.f32 %v675, %v1004
        %v1272 = vmul.f32 %v675, %v1008
        %v1273 = vmul.f32 %v680, %v996
        %v1274 = vmul.f32 %v680, %v1000
        %v1275 = vmul.f32 %v680, %v1004
        %v1276 = vmul.f32 %v680, %v1008
        %v1277 = vmul.f32 %v685, %v996
        %v1278 = vmul.f32 %v685, %v1000
        %v1279 = vmul.f32 %v685, %v1004
        %v1280 = vmul.f32 %v685, %v1008
        %v1281 = vmul.f32 %v690, %v996
        %v1282 = vmul.f32 %v690, %v1000
        %v1283 = vmul.f32 %v690, %v1004
        %v1284 = vmul.f32 %v690, %v1008
        %v1285 = vmul.f32 %v695, %v996
        %v1286 = vmul.f32 %v695, %v1000
        %v1287 = vmul.f32 %v695, %v1004
        %v1288 = vmul.f32 %v695, %v1008
        %v1289 = vmul.f32 %v700, %v996
        %v1290 = vmul.f32 %v700, %v1000
        %v1291 = vmul.f32 %v700, %v1004
        %v1292 = vmul.f32 %v700, %v1008
        %v1293 = vmul.f32 %v705, %v996
        %v1294 = vmul.f32 %v705, %v1000
        %v1295 = vmul.f32 %v705, %v1004
        %v1296 = vmul.f32 %v705, %v1008
        %v1297 = vmul.f32 %v710, %v996
        %v1298 = vmul.f32 %v710, %v1000
        %v1299 = vmul.f32 %v710, %v1004
        %v1300 = vmul.f32 %v710, %v1008
        %v1301 = vmul.f32 %v715, %v996
        %v1302 = vmul.f32 %v715, %v1000
        %v1303 = vmul.f32 %v715, %v1004
        %v1304 = vmul.f32 %v715, %v1008
        %v1305 = vmul.f32 %v720, %v996
        %v1306 = vmul.f32 %v720, %v1000
        %v1307 = vmul.f32 %v720, %v1004
        %v1308 = vmul.f32 %v720, %v1008
        %v1309 = vmul.f32 %v725, %v996
        %v1310 = vmul.f32 %v725, %v1000
        %v1311 = vmul.f32 %v725, %v1004
        %v1312 = vmul.f32 %v725, %v1008
        %v1313 = vmul.f32 %v730, %v996
        %v1314 = vmul.f32 %v730, %v1000
        %v1315 = vmul.f32 %v730, %v1004
        %v1316 = vmul.f32 %v730, %v1008
        %v1317 = vmul.f32 %v735, %v996
        %v1318 = vmul.f32 %v735, %v1000
        %v1319 = vmul.f32 %v735, %v1004
        %v1320 = vmul.f32 %v735, %v1008
        %v1321 = vmul.f32 %v740, %v996
        %v1322 = vmul.f32 %v740, %v1000
        %v1323 = vmul.f32 %v740, %v1004
        %v1324 = vmul.f32 %v740, %v1008
        %v1325 = vmul.f32 %v745, %v996
        %v1326 = vmul.f32 %v745, %v1000
        %v1327 = vmul.f32 %v745, %v1004
        %v1328 = vmul.f32 %v745, %v1008
        %v1329 = vmul.f32 %v750, %v996
        %v1330 = vmul.f32 %v750, %v1000
        %v1331 = vmul.f32 %v750, %v1004
        %v1332 = vmul.f32 %v750, %v1008
        %v1333 = vmul.f32 %v755, %v996
        %v1334 = vmul.f32 %v755, %v1000
        %v1335 = vmul.f32 %v755, %v1004
        %v1336 = vmul.f32 %v755, %v1008
        %v1337 = vmul.f32 %v760, %v996
        %v1338 = vmul.f32 %v760, %v1000
        %v1339 = vmul.f32 %v760, %v1004
        %v1340 = vmul.f32 %v760, %v1008
        %v1341 = vmul.f32 %v765, %v996
        %v1342 = vmul.f32 %v765, %v1000
        %v1343 = vmul.f32 %v765, %v1004
        %v1344 = vmul.f32 %v765, %v1008
        %v1345 = vmul.f32 %v770, %v996
        %v1346 = vmul.f32 %v770, %v1000
        %v1347 = vmul.f32 %v770, %v1004
        %v1348 = vmul.f32 %v770, %v1008
        %v1349 = vmul.f32 %v775, %v996
        %v1350 = vmul.f32 %v775, %v1000
        %v1351 = vmul.f32 %v775, %v1004
        %v1352 = vmul.f32 %v775, %v1008
        %v1353 = vmul.f32 %v780, %v996
        %v1354 = vmul.f32 %v780, %v1000
        %v1355 = vmul.f32 %v780, %v1004
        %v1356 = vmul.f32 %v780, %v1008
        %v1357 = vmul.f32 %v785, %v996
        %v1358 = vmul.f32 %v785, %v1000
        %v1359 = vmul.f32 %v785, %v1004
        %v1360 = vmul.f32 %v785, %v1008
        %v1361 = vmul.f32 %v790, %v996
        %v1362 = vmul.f32 %v790, %v1000
        %v1363 = vmul.f32 %v790, %v1004
        %v1364 = vmul.f32 %v790, %v1008
        %v1365 = vmul.f32 %v795, %v996
        %v1366 = vmul.f32 %v795, %v1000
        %v1367 = vmul.f32 %v795, %v1004
        %v1368 = vmul.f32 %v795, %v1008
        %v1369 = vmul.f32 %v800, %v996
        %v1370 = vmul.f32 %v800, %v1000
        %v1371 = vmul.f32 %v800, %v1004
        %v1372 = vmul.f32 %v800, %v1008
        %v1373 = vmul.f32 %v805, %v996
        %v1374 = vmul.f32 %v805, %v1000
        %v1375 = vmul.f32 %v805, %v1004
        %v1376 = vmul.f32 %v805, %v1008
        %v1377 = vmul.f32 %v810, %v996
        %v1378 = vmul.f32 %v810, %v1000
        %v1379 = vmul.f32 %v810, %v1004
        %v1380 = vmul.f32 %v810, %v1008
        %v1381 = vmul.f32 %v815, %v996
        %v1382 = vmul.f32 %v815, %v1000
        %v1383 = vmul.f32 %v815, %v1004
        %v1384 = vmul.f32 %v815, %v1008
        %v1385 = vmul.f32 %v820, %v996
        %v1386 = vmul.f32 %v820, %v1000
        %v1387 = vmul.f32 %v820, %v1004
        %v1388 = vmul.f32 %v820, %v1008
        %v1389 = vmul.f32 %v825, %v996
        %v1390 = vmul.f32 %v825, %v1000
        %v1391 = vmul.f32 %v825, %v1004
        %v1392 = vmul.f32 %v825, %v1008
        %v1393 = vmul.f32 %v830, %v996
        %v1394 = vmul.f32 %v830, %v1000
        %v1395 = vmul.f32 %v830, %v1004
        %v1396 = vmul.f32 %v830, %v1008
        %v1397 = vmul.f32 %v835, %v996
        %v1398 = vmul.f32 %v835, %v1000
        %v1399 = vmul.f32 %v835, %v1004
        %v1400 = vmul.f32 %v835, %v1008
        %v1401 = vmul.f32 %v840, %v996
        %v1402 = vmul.f32 %v840, %v1000
        %v1403 = vmul.f32 %v840, %v1004
        %v1404 = vmul.f32 %v840, %v1008
        %v1405 = vmul.f32 %v845, %v996
        %v1406 = vmul.f32 %v845, %v1000
        %v1407 = vmul.f32 %v845, %v1004
        %v1408 = vmul.f32 %v845, %v1008
        %v1409 = vmul.f32 %v850, %v996
        %v1410 = vmul.f32 %v850, %v1000
        %v1411 = vmul.f32 %v850, %v1004
        %v1412 = vmul.f32 %v850, %v1008
        %v1413 = vmul.f32 %v855, %v996
        %v1414 = vmul.f32 %v855, %v1000
        %v1415 = vmul.f32 %v855, %v1004
        %v1416 = vmul.f32 %v855, %v1008
        %v1417 = vmul.f32 %v860, %v996
        %v1418 = vmul.f32 %v860, %v1000
        %v1419 = vmul.f32 %v860, %v1004
        %v1420 = vmul.f32 %v860, %v1008
        %v1421 = vmul.f32 %v865, %v996
        %v1422 = vmul.f32 %v865, %v1000
        %v1423 = vmul.f32 %v865, %v1004
        %v1424 = vmul.f32 %v865, %v1008
        %v1425 = vmul.f32 %v870, %v996
        %v1426 = vmul.f32 %v870, %v1000
        %v1427 = vmul.f32 %v870, %v1004
        %v1428 = vmul.f32 %v870, %v1008
        %v1429 = vmul.f32 %v875, %v996
        %v1430 = vmul.f32 %v875, %v1000
        %v1431 = vmul.f32 %v875, %v1004
        %v1432 = vmul.f32 %v875, %v1008
        %v1433 = vmul.f32 %v880, %v996
        %v1434 = vmul.f32 %v880, %v1000
        %v1435 = vmul.f32 %v880, %v1004
        %v1436 = vmul.f32 %v880, %v1008
        %v1437 = vmul.f32 %v885, %v996
        %v1438 = vmul.f32 %v885, %v1000
        %v1439 = vmul.f32 %v885, %v1004
        %v1440 = vmul.f32 %v885, %v1008
        %v1441 = vmul.f32 %v890, %v996
        %v1442 = vmul.f32 %v890, %v1000
        %v1443 = vmul.f32 %v890, %v1004
        %v1444 = vmul.f32 %v890, %v1008
        %v1445 = vmul.f32 %v895, %v996
        %v1446 = vmul.f32 %v895, %v1000
        %v1447 = vmul.f32 %v895, %v1004
        %v1448 = vmul.f32 %v895, %v1008
        %v1449 = vmul.f32 %v900, %v996
        %v1450 = vmul.f32 %v900, %v1000
        %v1451 = vmul.f32 %v900, %v1004
        %v1452 = vmul.f32 %v900, %v1008
        %v1453 = vmul.f32 %v905, %v996
        %v1454 = vmul.f32 %v905, %v1000
        %v1455 = vmul.f32 %v905, %v1004
        %v1456 = vmul.f32 %v905, %v1008
        %v1457 = vmul.f32 %v910, %v996
        %v1458 = vmul.f32 %v910, %v1000
        %v1459 = vmul.f32 %v910, %v1004
        %v1460 = vmul.f32 %v910, %v1008
        %v1461 = vmul.f32 %v915, %v996
        %v1462 = vmul.f32 %v915, %v1000
        %v1463 = vmul.f32 %v915, %v1004
        %v1464 = vmul.f32 %v915, %v1008
        %v1465 = vmul.f32 %v920, %v996
        %v1466 = vmul.f32 %v920, %v1000
        %v1467 = vmul.f32 %v920, %v1004
        %v1468 = vmul.f32 %v920, %v1008
        %v1469 = vmul.f32 %v925, %v996
        %v1470 = vmul.f32 %v925, %v1000
        %v1471 = vmul.f32 %v925, %v1004
        %v1472 = vmul.f32 %v925, %v1008
        %v1473 = vmul.f32 %v930, %v996
        %v1474 = vmul.f32 %v930, %v1000
        %v1475 = vmul.f32 %v930, %v1004
        %v1476 = vmul.f32 %v930, %v1008
        %v1477 = vmul.f32 %v935, %v996
        %v1478 = vmul.f32 %v935, %v1000
        %v1479 = vmul.f32 %v935, %v1004
        %v1480 = vmul.f32 %v935, %v1008
        %v1481 = vmul.f32 %v940, %v996
        %v1482 = vmul.f32 %v940, %v1000
        %v1483 = vmul.f32 %v940, %v1004
        %v1484 = vmul.f32 %v940, %v1008
        %v1485 = vmul.f32 %v945, %v996
        %v1486 = vmul.f32 %v945, %v1000
        %v1487 = vmul.f32 %v945, %v1004
        %v1488 = vmul.f32 %v945, %v1008
        %v1489 = vmul.f32 %v950, %v996
        %v1490 = vmul.f32 %v950, %v1000
        %v1491 = vmul.f32 %v950, %v1004
        %v1492 = vmul.f32 %v950, %v1008
        %v1493 = vmul.f32 %v955, %v996
        %v1494 = vmul.f32 %v955, %v1000
        %v1495 = vmul.f32 %v955, %v1004
        %v1496 = vmul.f32 %v955, %v1008
        %v1497 = vmul.f32 %v960, %v996
        %v1498 = vmul.f32 %v960, %v1000
        %v1499 = vmul.f32 %v960, %v1004
        %v1500 = vmul.f32 %v960, %v1008
        %v1501 = vmul.f32 %v965, %v996
        %v1502 = vmul.f32 %v965, %v1000
        %v1503 = vmul.f32 %v965, %v1004
        %v1504 = vmul.f32 %v965, %v1008
        %v1505 = vmul.f32 %v970, %v996
        %v1506 = vmul.f32 %v970, %v1000
        %v1507 = vmul.f32 %v970, %v1004
        %v1508 = vmul.f32 %v970, %v1008
        %v1509 = vmul.f32 %v975, %v996
        %v1510 = vmul.f32 %v975, %v1000
        %v1511 = vmul.f32 %v975, %v1004
        %v1512 = vmul.f32 %v975, %v1008
        %v1513 = vmul.f32 %v980, %v996
        %v1514 = vmul.f32 %v980, %v1000
        %v1515 = vmul.f32 %v980, %v1004
        %v1516 = vmul.f32 %v980, %v1008
        %v1517 = vmul.f32 %v985, %v996
        %v1518 = vmul.f32 %v985, %v1000
        %v1519 = vmul.f32 %v985, %v1004
        %v1520 = vmul.f32 %v985, %v1008
        %v1521 = vmul.f32 %v990, %v996
        %v1522 = vmul.f32 %v990, %v1000
        %v1523 = vmul.f32 %v990, %v1004
        %v1524 = vmul.f32 %v990, %v1008
        %v1525 = vld [vmem:[#allocation5] sm:$0xf]
        %v1527 = vlaneseq
        %v1528 = vshrl.u32 %v1527, 7
        %v1529 = vsub.s32 0, %v1528
        %v1530 = vrot.slane %v1525, %v1529
        %v1531 = vlaneseq
        %v1532 = vshrl.u32 %v1531, 7
        %v1533 = vsub.s32 1, %v1532
        %v1534 = vrot.slane %v1525, %v1533
        %v1535 = vlaneseq
        %v1536 = vshrl.u32 %v1535, 7
        %v1537 = vsub.s32 2, %v1536
        %v1538 = vrot.slane %v1525, %v1537
        %v1539 = vlaneseq
        %v1540 = vshrl.u32 %v1539, 7
        %v1541 = vsub.s32 3, %v1540
        %v1542 = vrot.slane %v1525, %v1541
        %v1547 = vadd.f32 %v1013, %v1530
        %v1548 = vadd.f32 %v1014, %v1534
        %v1549 = vadd.f32 %v1015, %v1538
        %v1550 = vadd.f32 %v1016, %v1542
        %v1551 = vadd.f32 %v1017, %v1530
        %v1552 = vadd.f32 %v1018, %v1534
        %v1553 = vadd.f32 %v1019, %v1538
        %v1554 = vadd.f32 %v1020, %v1542
        %v1555 = vadd.f32 %v1021, %v1530
        %v1556 = vadd.f32 %v1022, %v1534
        %v1557 = vadd.f32 %v1023, %v1538
        %v1558 = vadd.f32 %v1024, %v1542
        %v1559 = vadd.f32 %v1025, %v1530
        %v1560 = vadd.f32 %v1026, %v1534
        %v1561 = vadd.f32 %v1027, %v1538
        %v1562 = vadd.f32 %v1028, %v1542
        %v1563 = vadd.f32 %v1029, %v1530
        %v1564 = vadd.f32 %v1030, %v1534
        %v1565 = vadd.f32 %v1031, %v1538
        %v1566 = vadd.f32 %v1032, %v1542
        %v1567 = vadd.f32 %v1033, %v1530
        %v1568 = vadd.f32 %v1034, %v1534
        %v1569 = vadd.f32 %v1035, %v1538
        %v1570 = vadd.f32 %v1036, %v1542
        %v1571 = vadd.f32 %v1037, %v1530
        %v1572 = vadd.f32 %v1038, %v1534
        %v1573 = vadd.f32 %v1039, %v1538
        %v1574 = vadd.f32 %v1040, %v1542
        %v1575 = vadd.f32 %v1041, %v1530
        %v1576 = vadd.f32 %v1042, %v1534
        %v1577 = vadd.f32 %v1043, %v1538
        %v1578 = vadd.f32 %v1044, %v1542
        %v1579 = vadd.f32 %v1045, %v1530
        %v1580 = vadd.f32 %v1046, %v1534
        %v1581 = vadd.f32 %v1047, %v1538
        %v1582 = vadd.f32 %v1048, %v1542
        %v1583 = vadd.f32 %v1049, %v1530
        %v1584 = vadd.f32 %v1050, %v1534
        %v1585 = vadd.f32 %v1051, %v1538
        %v1586 = vadd.f32 %v1052, %v1542
        %v1587 = vadd.f32 %v1053, %v1530
        %v1588 = vadd.f32 %v1054, %v1534
        %v1589 = vadd.f32 %v1055, %v1538
        %v1590 = vadd.f32 %v1056, %v1542
        %v1591 = vadd.f32 %v1057, %v1530
        %v1592 = vadd.f32 %v1058, %v1534
        %v1593 = vadd.f32 %v1059, %v1538
        %v1594 = vadd.f32 %v1060, %v1542
        %v1595 = vadd.f32 %v1061, %v1530
        %v1596 = vadd.f32 %v1062, %v1534
        %v1597 = vadd.f32 %v1063, %v1538
        %v1598 = vadd.f32 %v1064, %v1542
        %v1599 = vadd.f32 %v1065, %v1530
        %v1600 = vadd.f32 %v1066, %v1534
        %v1601 = vadd.f32 %v1067, %v1538
        %v1602 = vadd.f32 %v1068, %v1542
        %v1603 = vadd.f32 %v1069, %v1530
        %v1604 = vadd.f32 %v1070, %v1534
        %v1605 = vadd.f32 %v1071, %v1538
        %v1606 = vadd.f32 %v1072, %v1542
        %v1607 = vadd.f32 %v1073, %v1530
        %v1608 = vadd.f32 %v1074, %v1534
        %v1609 = vadd.f32 %v1075, %v1538
        %v1610 = vadd.f32 %v1076, %v1542
        %v1611 = vadd.f32 %v1077, %v1530
        %v1612 = vadd.f32 %v1078, %v1534
        %v1613 = vadd.f32 %v1079, %v1538
        %v1614 = vadd.f32 %v1080, %v1542
        %v1615 = vadd.f32 %v1081, %v1530
        %v1616 = vadd.f32 %v1082, %v1534
        %v1617 = vadd.f32 %v1083, %v1538
        %v1618 = vadd.f32 %v1084, %v1542
        %v1619 = vadd.f32 %v1085, %v1530
        %v1620 = vadd.f32 %v1086, %v1534
        %v1621 = vadd.f32 %v1087, %v1538
        %v1622 = vadd.f32 %v1088, %v1542
        %v1623 = vadd.f32 %v1089, %v1530
        %v1624 = vadd.f32 %v1090, %v1534
        %v1625 = vadd.f32 %v1091, %v1538
        %v1626 = vadd.f32 %v1092, %v1542
        %v1627 = vadd.f32 %v1093, %v1530
        %v1628 = vadd.f32 %v1094, %v1534
        %v1629 = vadd.f32 %v1095, %v1538
        %v1630 = vadd.f32 %v1096, %v1542
        %v1631 = vadd.f32 %v1097, %v1530
        %v1632 = vadd.f32 %v1098, %v1534
        %v1633 = vadd.f32 %v1099, %v1538
        %v1634 = vadd.f32 %v1100, %v1542
        %v1635 = vadd.f32 %v1101, %v1530
        %v1636 = vadd.f32 %v1102, %v1534
        %v1637 = vadd.f32 %v1103, %v1538
        %v1638 = vadd.f32 %v1104, %v1542
        %v1639 = vadd.f32 %v1105, %v1530
        %v1640 = vadd.f32 %v1106, %v1534
        %v1641 = vadd.f32 %v1107, %v1538
        %v1642 = vadd.f32 %v1108, %v1542
        %v1643 = vadd.f32 %v1109, %v1530
        %v1644 = vadd.f32 %v1110, %v1534
        %v1645 = vadd.f32 %v1111, %v1538
        %v1646 = vadd.f32 %v1112, %v1542
        %v1647 = vadd.f32 %v1113, %v1530
        %v1648 = vadd.f32 %v1114, %v1534
        %v1649 = vadd.f32 %v1115, %v1538
        %v1650 = vadd.f32 %v1116, %v1542
        %v1651 = vadd.f32 %v1117, %v1530
        %v1652 = vadd.f32 %v1118, %v1534
        %v1653 = vadd.f32 %v1119, %v1538
        %v1654 = vadd.f32 %v1120, %v1542
        %v1655 = vadd.f32 %v1121, %v1530
        %v1656 = vadd.f32 %v1122, %v1534
        %v1657 = vadd.f32 %v1123, %v1538
        %v1658 = vadd.f32 %v1124, %v1542
        %v1659 = vadd.f32 %v1125, %v1530
        %v1660 = vadd.f32 %v1126, %v1534
        %v1661 = vadd.f32 %v1127, %v1538
        %v1662 = vadd.f32 %v1128, %v1542
        %v1663 = vadd.f32 %v1129, %v1530
        %v1664 = vadd.f32 %v1130, %v1534
        %v1665 = vadd.f32 %v1131, %v1538
        %v1666 = vadd.f32 %v1132, %v1542
        %v1667 = vadd.f32 %v1133, %v1530
        %v1668 = vadd.f32 %v1134, %v1534
        %v1669 = vadd.f32 %v1135, %v1538
        %v1670 = vadd.f32 %v1136, %v1542
        %v1671 = vadd.f32 %v1137, %v1530
        %v1672 = vadd.f32 %v1138, %v1534
        %v1673 = vadd.f32 %v1139, %v1538
        %v1674 = vadd.f32 %v1140, %v1542
        %v1675 = vadd.f32 %v1141, %v1530
        %v1676 = vadd.f32 %v1142, %v1534
        %v1677 = vadd.f32 %v1143, %v1538
        %v1678 = vadd.f32 %v1144, %v1542
        %v1679 = vadd.f32 %v1145, %v1530
        %v1680 = vadd.f32 %v1146, %v1534
        %v1681 = vadd.f32 %v1147, %v1538
        %v1682 = vadd.f32 %v1148, %v1542
        %v1683 = vadd.f32 %v1149, %v1530
        %v1684 = vadd.f32 %v1150, %v1534
        %v1685 = vadd.f32 %v1151, %v1538
        %v1686 = vadd.f32 %v1152, %v1542
        %v1687 = vadd.f32 %v1153, %v1530
        %v1688 = vadd.f32 %v1154, %v1534
        %v1689 = vadd.f32 %v1155, %v1538
        %v1690 = vadd.f32 %v1156, %v1542
        %v1691 = vadd.f32 %v1157, %v1530
        %v1692 = vadd.f32 %v1158, %v1534
        %v1693 = vadd.f32 %v1159, %v1538
        %v1694 = vadd.f32 %v1160, %v1542
        %v1695 = vadd.f32 %v1161, %v1530
        %v1696 = vadd.f32 %v1162, %v1534
        %v1697 = vadd.f32 %v1163, %v1538
        %v1698 = vadd.f32 %v1164, %v1542
        %v1699 = vadd.f32 %v1165, %v1530
        %v1700 = vadd.f32 %v1166, %v1534
        %v1701 = vadd.f32 %v1167, %v1538
        %v1702 = vadd.f32 %v1168, %v1542
        %v1703 = vadd.f32 %v1169, %v1530
        %v1704 = vadd.f32 %v1170, %v1534
        %v1705 = vadd.f32 %v1171, %v1538
        %v1706 = vadd.f32 %v1172, %v1542
        %v1707 = vadd.f32 %v1173, %v1530
        %v1708 = vadd.f32 %v1174, %v1534
        %v1709 = vadd.f32 %v1175, %v1538
        %v1710 = vadd.f32 %v1176, %v1542
        %v1711 = vadd.f32 %v1177, %v1530
        %v1712 = vadd.f32 %v1178, %v1534
        %v1713 = vadd.f32 %v1179, %v1538
        %v1714 = vadd.f32 %v1180, %v1542
        %v1715 = vadd.f32 %v1181, %v1530
        %v1716 = vadd.f32 %v1182, %v1534
        %v1717 = vadd.f32 %v1183, %v1538
        %v1718 = vadd.f32 %v1184, %v1542
        %v1719 = vadd.f32 %v1185, %v1530
        %v1720 = vadd.f32 %v1186, %v1534
        %v1721 = vadd.f32 %v1187, %v1538
        %v1722 = vadd.f32 %v1188, %v1542
        %v1723 = vadd.f32 %v1189, %v1530
        %v1724 = vadd.f32 %v1190, %v1534
        %v1725 = vadd.f32 %v1191, %v1538
        %v1726 = vadd.f32 %v1192, %v1542
        %v1727 = vadd.f32 %v1193, %v1530
        %v1728 = vadd.f32 %v1194, %v1534
        %v1729 = vadd.f32 %v1195, %v1538
        %v1730 = vadd.f32 %v1196, %v1542
        %v1731 = vadd.f32 %v1197, %v1530
        %v1732 = vadd.f32 %v1198, %v1534
        %v1733 = vadd.f32 %v1199, %v1538
        %v1734 = vadd.f32 %v1200, %v1542
        %v1735 = vadd.f32 %v1201, %v1530
        %v1736 = vadd.f32 %v1202, %v1534
        %v1737 = vadd.f32 %v1203, %v1538
        %v1738 = vadd.f32 %v1204, %v1542
        %v1739 = vadd.f32 %v1205, %v1530
        %v1740 = vadd.f32 %v1206, %v1534
        %v1741 = vadd.f32 %v1207, %v1538
        %v1742 = vadd.f32 %v1208, %v1542
        %v1743 = vadd.f32 %v1209, %v1530
        %v1744 = vadd.f32 %v1210, %v1534
        %v1745 = vadd.f32 %v1211, %v1538
        %v1746 = vadd.f32 %v1212, %v1542
        %v1747 = vadd.f32 %v1213, %v1530
        %v1748 = vadd.f32 %v1214, %v1534
        %v1749 = vadd.f32 %v1215, %v1538
        %v1750 = vadd.f32 %v1216, %v1542
        %v1751 = vadd.f32 %v1217, %v1530
        %v1752 = vadd.f32 %v1218, %v1534
        %v1753 = vadd.f32 %v1219, %v1538
        %v1754 = vadd.f32 %v1220, %v1542
        %v1755 = vadd.f32 %v1221, %v1530
        %v1756 = vadd.f32 %v1222, %v1534
        %v1757 = vadd.f32 %v1223, %v1538
        %v1758 = vadd.f32 %v1224, %v1542
        %v1759 = vadd.f32 %v1225, %v1530
        %v1760 = vadd.f32 %v1226, %v1534
        %v1761 = vadd.f32 %v1227, %v1538
        %v1762 = vadd.f32 %v1228, %v1542
        %v1763 = vadd.f32 %v1229, %v1530
        %v1764 = vadd.f32 %v1230, %v1534
        %v1765 = vadd.f32 %v1231, %v1538
        %v1766 = vadd.f32 %v1232, %v1542
        %v1767 = vadd.f32 %v1233, %v1530
        %v1768 = vadd.f32 %v1234, %v1534
        %v1769 = vadd.f32 %v1235, %v1538
        %v1770 = vadd.f32 %v1236, %v1542
        %v1771 = vadd.f32 %v1237, %v1530
        %v1772 = vadd.f32 %v1238, %v1534
        %v1773 = vadd.f32 %v1239, %v1538
        %v1774 = vadd.f32 %v1240, %v1542
        %v1775 = vadd.f32 %v1241, %v1530
        %v1776 = vadd.f32 %v1242, %v1534
        %v1777 = vadd.f32 %v1243, %v1538
        %v1778 = vadd.f32 %v1244, %v1542
        %v1779 = vadd.f32 %v1245, %v1530
        %v1780 = vadd.f32 %v1246, %v1534
        %v1781 = vadd.f32 %v1247, %v1538
        %v1782 = vadd.f32 %v1248, %v1542
        %v1783 = vadd.f32 %v1249, %v1530
        %v1784 = vadd.f32 %v1250, %v1534
        %v1785 = vadd.f32 %v1251, %v1538
        %v1786 = vadd.f32 %v1252, %v1542
        %v1787 = vadd.f32 %v1253, %v1530
        %v1788 = vadd.f32 %v1254, %v1534
        %v1789 = vadd.f32 %v1255, %v1538
        %v1790 = vadd.f32 %v1256, %v1542
        %v1791 = vadd.f32 %v1257, %v1530
        %v1792 = vadd.f32 %v1258, %v1534
        %v1793 = vadd.f32 %v1259, %v1538
        %v1794 = vadd.f32 %v1260, %v1542
        %v1795 = vadd.f32 %v1261, %v1530
        %v1796 = vadd.f32 %v1262, %v1534
        %v1797 = vadd.f32 %v1263, %v1538
        %v1798 = vadd.f32 %v1264, %v1542
        %v1799 = vadd.f32 %v1265, %v1530
        %v1800 = vadd.f32 %v1266, %v1534
        %v1801 = vadd.f32 %v1267, %v1538
        %v1802 = vadd.f32 %v1268, %v1542
        %v1803 = vadd.f32 %v1269, %v1530
        %v1804 = vadd.f32 %v1270, %v1534
        %v1805 = vadd.f32 %v1271, %v1538
        %v1806 = vadd.f32 %v1272, %v1542
        %v1807 = vadd.f32 %v1273, %v1530
        %v1808 = vadd.f32 %v1274, %v1534
        %v1809 = vadd.f32 %v1275, %v1538
        %v1810 = vadd.f32 %v1276, %v1542
        %v1811 = vadd.f32 %v1277, %v1530
        %v1812 = vadd.f32 %v1278, %v1534
        %v1813 = vadd.f32 %v1279, %v1538
        %v1814 = vadd.f32 %v1280, %v1542
        %v1815 = vadd.f32 %v1281, %v1530
        %v1816 = vadd.f32 %v1282, %v1534
        %v1817 = vadd.f32 %v1283, %v1538
        %v1818 = vadd.f32 %v1284, %v1542
        %v1819 = vadd.f32 %v1285, %v1530
        %v1820 = vadd.f32 %v1286, %v1534
        %v1821 = vadd.f32 %v1287, %v1538
        %v1822 = vadd.f32 %v1288, %v1542
        %v1823 = vadd.f32 %v1289, %v1530
        %v1824 = vadd.f32 %v1290, %v1534
        %v1825 = vadd.f32 %v1291, %v1538
        %v1826 = vadd.f32 %v1292, %v1542
        %v1827 = vadd.f32 %v1293, %v1530
        %v1828 = vadd.f32 %v1294, %v1534
        %v1829 = vadd.f32 %v1295, %v1538
        %v1830 = vadd.f32 %v1296, %v1542
        %v1831 = vadd.f32 %v1297, %v1530
        %v1832 = vadd.f32 %v1298, %v1534
        %v1833 = vadd.f32 %v1299, %v1538
        %v1834 = vadd.f32 %v1300, %v1542
        %v1835 = vadd.f32 %v1301, %v1530
        %v1836 = vadd.f32 %v1302, %v1534
        %v1837 = vadd.f32 %v1303, %v1538
        %v1838 = vadd.f32 %v1304, %v1542
        %v1839 = vadd.f32 %v1305, %v1530
        %v1840 = vadd.f32 %v1306, %v1534
        %v1841 = vadd.f32 %v1307, %v1538
        %v1842 = vadd.f32 %v1308, %v1542
        %v1843 = vadd.f32 %v1309, %v1530
        %v1844 = vadd.f32 %v1310, %v1534
        %v1845 = vadd.f32 %v1311, %v1538
        %v1846 = vadd.f32 %v1312, %v1542
        %v1847 = vadd.f32 %v1313, %v1530
        %v1848 = vadd.f32 %v1314, %v1534
        %v1849 = vadd.f32 %v1315, %v1538
        %v1850 = vadd.f32 %v1316, %v1542
        %v1851 = vadd.f32 %v1317, %v1530
        %v1852 = vadd.f32 %v1318, %v1534
        %v1853 = vadd.f32 %v1319, %v1538
        %v1854 = vadd.f32 %v1320, %v1542
        %v1855 = vadd.f32 %v1321, %v1530
        %v1856 = vadd.f32 %v1322, %v1534
        %v1857 = vadd.f32 %v1323, %v1538
        %v1858 = vadd.f32 %v1324, %v1542
        %v1859 = vadd.f32 %v1325, %v1530
        %v1860 = vadd.f32 %v1326, %v1534
        %v1861 = vadd.f32 %v1327, %v1538
        %v1862 = vadd.f32 %v1328, %v1542
        %v1863 = vadd.f32 %v1329, %v1530
        %v1864 = vadd.f32 %v1330, %v1534
        %v1865 = vadd.f32 %v1331, %v1538
        %v1866 = vadd.f32 %v1332, %v1542
        %v1867 = vadd.f32 %v1333, %v1530
        %v1868 = vadd.f32 %v1334, %v1534
        %v1869 = vadd.f32 %v1335, %v1538
        %v1870 = vadd.f32 %v1336, %v1542
        %v1871 = vadd.f32 %v1337, %v1530
        %v1872 = vadd.f32 %v1338, %v1534
        %v1873 = vadd.f32 %v1339, %v1538
        %v1874 = vadd.f32 %v1340, %v1542
        %v1875 = vadd.f32 %v1341, %v1530
        %v1876 = vadd.f32 %v1342, %v1534
        %v1877 = vadd.f32 %v1343, %v1538
        %v1878 = vadd.f32 %v1344, %v1542
        %v1879 = vadd.f32 %v1345, %v1530
        %v1880 = vadd.f32 %v1346, %v1534
        %v1881 = vadd.f32 %v1347, %v1538
        %v1882 = vadd.f32 %v1348, %v1542
        %v1883 = vadd.f32 %v1349, %v1530
        %v1884 = vadd.f32 %v1350, %v1534
        %v1885 = vadd.f32 %v1351, %v1538
        %v1886 = vadd.f32 %v1352, %v1542
        %v1887 = vadd.f32 %v1353, %v1530
        %v1888 = vadd.f32 %v1354, %v1534
        %v1889 = vadd.f32 %v1355, %v1538
        %v1890 = vadd.f32 %v1356, %v1542
        %v1891 = vadd.f32 %v1357, %v1530
        %v1892 = vadd.f32 %v1358, %v1534
        %v1893 = vadd.f32 %v1359, %v1538
        %v1894 = vadd.f32 %v1360, %v1542
        %v1895 = vadd.f32 %v1361, %v1530
        %v1896 = vadd.f32 %v1362, %v1534
        %v1897 = vadd.f32 %v1363, %v1538
        %v1898 = vadd.f32 %v1364, %v1542
        %v1899 = vadd.f32 %v1365, %v1530
        %v1900 = vadd.f32 %v1366, %v1534
        %v1901 = vadd.f32 %v1367, %v1538
        %v1902 = vadd.f32 %v1368, %v1542
        %v1903 = vadd.f32 %v1369, %v1530
        %v1904 = vadd.f32 %v1370, %v1534
        %v1905 = vadd.f32 %v1371, %v1538
        %v1906 = vadd.f32 %v1372, %v1542
        %v1907 = vadd.f32 %v1373, %v1530
        %v1908 = vadd.f32 %v1374, %v1534
        %v1909 = vadd.f32 %v1375, %v1538
        %v1910 = vadd.f32 %v1376, %v1542
        %v1911 = vadd.f32 %v1377, %v1530
        %v1912 = vadd.f32 %v1378, %v1534
        %v1913 = vadd.f32 %v1379, %v1538
        %v1914 = vadd.f32 %v1380, %v1542
        %v1915 = vadd.f32 %v1381, %v1530
        %v1916 = vadd.f32 %v1382, %v1534
        %v1917 = vadd.f32 %v1383, %v1538
        %v1918 = vadd.f32 %v1384, %v1542
        %v1919 = vadd.f32 %v1385, %v1530
        %v1920 = vadd.f32 %v1386, %v1534
        %v1921 = vadd.f32 %v1387, %v1538
        %v1922 = vadd.f32 %v1388, %v1542
        %v1923 = vadd.f32 %v1389, %v1530
        %v1924 = vadd.f32 %v1390, %v1534
        %v1925 = vadd.f32 %v1391, %v1538
        %v1926 = vadd.f32 %v1392, %v1542
        %v1927 = vadd.f32 %v1393, %v1530
        %v1928 = vadd.f32 %v1394, %v1534
        %v1929 = vadd.f32 %v1395, %v1538
        %v1930 = vadd.f32 %v1396, %v1542
        %v1931 = vadd.f32 %v1397, %v1530
        %v1932 = vadd.f32 %v1398, %v1534
        %v1933 = vadd.f32 %v1399, %v1538
        %v1934 = vadd.f32 %v1400, %v1542
        %v1935 = vadd.f32 %v1401, %v1530
        %v1936 = vadd.f32 %v1402, %v1534
        %v1937 = vadd.f32 %v1403, %v1538
        %v1938 = vadd.f32 %v1404, %v1542
        %v1939 = vadd.f32 %v1405, %v1530
        %v1940 = vadd.f32 %v1406, %v1534
        %v1941 = vadd.f32 %v1407, %v1538
        %v1942 = vadd.f32 %v1408, %v1542
        %v1943 = vadd.f32 %v1409, %v1530
        %v1944 = vadd.f32 %v1410, %v1534
        %v1945 = vadd.f32 %v1411, %v1538
        %v1946 = vadd.f32 %v1412, %v1542
        %v1947 = vadd.f32 %v1413, %v1530
        %v1948 = vadd.f32 %v1414, %v1534
        %v1949 = vadd.f32 %v1415, %v1538
        %v1950 = vadd.f32 %v1416, %v1542
        %v1951 = vadd.f32 %v1417, %v1530
        %v1952 = vadd.f32 %v1418, %v1534
        %v1953 = vadd.f32 %v1419, %v1538
        %v1954 = vadd.f32 %v1420, %v1542
        %v1955 = vadd.f32 %v1421, %v1530
        %v1956 = vadd.f32 %v1422, %v1534
        %v1957 = vadd.f32 %v1423, %v1538
        %v1958 = vadd.f32 %v1424, %v1542
        %v1959 = vadd.f32 %v1425, %v1530
        %v1960 = vadd.f32 %v1426, %v1534
        %v1961 = vadd.f32 %v1427, %v1538
        %v1962 = vadd.f32 %v1428, %v1542
        %v1963 = vadd.f32 %v1429, %v1530
        %v1964 = vadd.f32 %v1430, %v1534
        %v1965 = vadd.f32 %v1431, %v1538
        %v1966 = vadd.f32 %v1432, %v1542
        %v1967 = vadd.f32 %v1433, %v1530
        %v1968 = vadd.f32 %v1434, %v1534
        %v1969 = vadd.f32 %v1435, %v1538
        %v1970 = vadd.f32 %v1436, %v1542
        %v1971 = vadd.f32 %v1437, %v1530
        %v1972 = vadd.f32 %v1438, %v1534
        %v1973 = vadd.f32 %v1439, %v1538
        %v1974 = vadd.f32 %v1440, %v1542
        %v1975 = vadd.f32 %v1441, %v1530
        %v1976 = vadd.f32 %v1442, %v1534
        %v1977 = vadd.f32 %v1443, %v1538
        %v1978 = vadd.f32 %v1444, %v1542
        %v1979 = vadd.f32 %v1445, %v1530
        %v1980 = vadd.f32 %v1446, %v1534
        %v1981 = vadd.f32 %v1447, %v1538
        %v1982 = vadd.f32 %v1448, %v1542
        %v1983 = vadd.f32 %v1449, %v1530
        %v1984 = vadd.f32 %v1450, %v1534
        %v1985 = vadd.f32 %v1451, %v1538
        %v1986 = vadd.f32 %v1452, %v1542
        %v1987 = vadd.f32 %v1453, %v1530
        %v1988 = vadd.f32 %v1454, %v1534
        %v1989 = vadd.f32 %v1455, %v1538
        %v1990 = vadd.f32 %v1456, %v1542
        %v1991 = vadd.f32 %v1457, %v1530
        %v1992 = vadd.f32 %v1458, %v1534
        %v1993 = vadd.f32 %v1459, %v1538
        %v1994 = vadd.f32 %v1460, %v1542
        %v1995 = vadd.f32 %v1461, %v1530
        %v1996 = vadd.f32 %v1462, %v1534
        %v1997 = vadd.f32 %v1463, %v1538
        %v1998 = vadd.f32 %v1464, %v1542
        %v1999 = vadd.f32 %v1465, %v1530
        %v2000 = vadd.f32 %v1466, %v1534
        %v2001 = vadd.f32 %v1467, %v1538
        %v2002 = vadd.f32 %v1468, %v1542
        %v2003 = vadd.f32 %v1469, %v1530
        %v2004 = vadd.f32 %v1470, %v1534
        %v2005 = vadd.f32 %v1471, %v1538
        %v2006 = vadd.f32 %v1472, %v1542
        %v2007 = vadd.f32 %v1473, %v1530
        %v2008 = vadd.f32 %v1474, %v1534
        %v2009 = vadd.f32 %v1475, %v1538
        %v2010 = vadd.f32 %v1476, %v1542
        %v2011 = vadd.f32 %v1477, %v1530
        %v2012 = vadd.f32 %v1478, %v1534
        %v2013 = vadd.f32 %v1479, %v1538
        %v2014 = vadd.f32 %v1480, %v1542
        %v2015 = vadd.f32 %v1481, %v1530
        %v2016 = vadd.f32 %v1482, %v1534
        %v2017 = vadd.f32 %v1483, %v1538
        %v2018 = vadd.f32 %v1484, %v1542
        %v2019 = vadd.f32 %v1485, %v1530
        %v2020 = vadd.f32 %v1486, %v1534
        %v2021 = vadd.f32 %v1487, %v1538
        %v2022 = vadd.f32 %v1488, %v1542
        %v2023 = vadd.f32 %v1489, %v1530
        %v2024 = vadd.f32 %v1490, %v1534
        %v2025 = vadd.f32 %v1491, %v1538
        %v2026 = vadd.f32 %v1492, %v1542
        %v2027 = vadd.f32 %v1493, %v1530
        %v2028 = vadd.f32 %v1494, %v1534
        %v2029 = vadd.f32 %v1495, %v1538
        %v2030 = vadd.f32 %v1496, %v1542
        %v2031 = vadd.f32 %v1497, %v1530
        %v2032 = vadd.f32 %v1498, %v1534
        %v2033 = vadd.f32 %v1499, %v1538
        %v2034 = vadd.f32 %v1500, %v1542
        %v2035 = vadd.f32 %v1501, %v1530
        %v2036 = vadd.f32 %v1502, %v1534
        %v2037 = vadd.f32 %v1503, %v1538
        %v2038 = vadd.f32 %v1504, %v1542
        %v2039 = vadd.f32 %v1505, %v1530
        %v2040 = vadd.f32 %v1506, %v1534
        %v2041 = vadd.f32 %v1507, %v1538
        %v2042 = vadd.f32 %v1508, %v1542
        %v2043 = vadd.f32 %v1509, %v1530
        %v2044 = vadd.f32 %v1510, %v1534
        %v2045 = vadd.f32 %v1511, %v1538
        %v2046 = vadd.f32 %v1512, %v1542
        %v2047 = vadd.f32 %v1513, %v1530
        %v2048 = vadd.f32 %v1514, %v1534
        %v2049 = vadd.f32 %v1515, %v1538
        %v2050 = vadd.f32 %v1516, %v1542
        %v2051 = vadd.f32 %v1517, %v1530
        %v2052 = vadd.f32 %v1518, %v1534
        %v2053 = vadd.f32 %v1519, %v1538
        %v2054 = vadd.f32 %v1520, %v1542
        %v2055 = vadd.f32 %v1521, %v1530
        %v2056 = vadd.f32 %v1522, %v1534
        %v2057 = vadd.f32 %v1523, %v1538
        %v2058 = vadd.f32 %v1524, %v1542
        %2059 = vst [vmem:[%s202] sm:$0xff] %v1547
        %2060 = vst [vmem:[%s202 + $0x8] sm:$0xff] %v1548
        %2061 = vst [vmem:[%s202 + $0x10] sm:$0xff] %v1549
        %2062 = vst [vmem:[%s202 + $0x18] sm:$0xff] %v1550
        %2063 = vst [vmem:[%s202 + $0x20] sm:$0xff] %v1551
        %2064 = vst [vmem:[%s202 + $0x28] sm:$0xff] %v1552
        %2065 = vst [vmem:[%s202 + $0x30] sm:$0xff] %v1553
        %2066 = vst [vmem:[%s202 + $0x38] sm:$0xff] %v1554
        %2067 = vst [vmem:[%s202 + $0x40] sm:$0xff] %v1555
        %2068 = vst [vmem:[%s202 + $0x48] sm:$0xff] %v1556
        %2069 = vst [vmem:[%s202 + $0x50] sm:$0xff] %v1557
        %2070 = vst [vmem:[%s202 + $0x58] sm:$0xff] %v1558
        %2071 = vst [vmem:[%s202 + $0x60] sm:$0xff] %v1559
        %2072 = vst [vmem:[%s202 + $0x68] sm:$0xff] %v1560
        %2073 = vst [vmem:[%s202 + $0x70] sm:$0xff] %v1561
        %2074 = vst [vmem:[%s202 + $0x78] sm:$0xff] %v1562
        %2075 = vst [vmem:[%s202 + $0x80] sm:$0xff] %v1563
        %2076 = vst [vmem:[%s202 + $0x88] sm:$0xff] %v1564
        %2077 = vst [vmem:[%s202 + $0x90] sm:$0xff] %v1565
        %2078 = vst [vmem:[%s202 + $0x98] sm:$0xff] %v1566
        %2079 = vst [vmem:[%s202 + $0xa0] sm:$0xff] %v1567
        %2080 = vst [vmem:[%s202 + $0xa8] sm:$0xff] %v1568
        %2081 = vst [vmem:[%s202 + $0xb0] sm:$0xff] %v1569
        %2082 = vst [vmem:[%s202 + $0xb8] sm:$0xff] %v1570
        %2083 = vst [vmem:[%s202 + $0xc0] sm:$0xff] %v1571
        %2084 = vst [vmem:[%s202 + $0xc8] sm:$0xff] %v1572
        %2085 = vst [vmem:[%s202 + $0xd0] sm:$0xff] %v1573
        %2086 = vst [vmem:[%s202 + $0xd8] sm:$0xff] %v1574
        %2087 = vst [vmem:[%s202 + $0xe0] sm:$0xff] %v1575
        %2088 = vst [vmem:[%s202 + $0xe8] sm:$0xff] %v1576
        %2089 = vst [vmem:[%s202 + $0xf0] sm:$0xff] %v1577
        %2090 = vst [vmem:[%s202 + $0xf8] sm:$0xff] %v1578
        %2091 = vst [vmem:[%s202 + $0x100] sm:$0xff] %v1579
        %2092 = vst [vmem:[%s202 + $0x108] sm:$0xff] %v1580
        %2093 = vst [vmem:[%s202 + $0x110] sm:$0xff] %v1581
        %2094 = vst [vmem:[%s202 + $0x118] sm:$0xff] %v1582
        %2095 = vst [vmem:[%s202 + $0x120] sm:$0xff] %v1583
        %2096 = vst [vmem:[%s202 + $0x128] sm:$0xff] %v1584
        %2097 = vst [vmem:[%s202 + $0x130] sm:$0xff] %v1585
        %2098 = vst [vmem:[%s202 + $0x138] sm:$0xff] %v1586
        %2099 = vst [vmem:[%s202 + $0x140] sm:$0xff] %v1587
        %2100 = vst [vmem:[%s202 + $0x148] sm:$0xff] %v1588
        %2101 = vst [vmem:[%s202 + $0x150] sm:$0xff] %v1589
        %2102 = vst [vmem:[%s202 + $0x158] sm:$0xff] %v1590
        %2103 = vst [vmem:[%s202 + $0x160] sm:$0xff] %v1591
        %2104 = vst [vmem:[%s202 + $0x168] sm:$0xff] %v1592
        %2105 = vst [vmem:[%s202 + $0x170] sm:$0xff] %v1593
        %2106 = vst [vmem:[%s202 + $0x178] sm:$0xff] %v1594
        %2107 = vst [vmem:[%s202 + $0x180] sm:$0xff] %v1595
        %2108 = vst [vmem:[%s202 + $0x188] sm:$0xff] %v1596
        %2109 = vst [vmem:[%s202 + $0x190] sm:$0xff] %v1597
        %2110 = vst [vmem:[%s202 + $0x198] sm:$0xff] %v1598
        %2111 = vst [vmem:[%s202 + $0x1a0] sm:$0xff] %v1599
        %2112 = vst [vmem:[%s202 + $0x1a8] sm:$0xff] %v1600
        %2113 = vst [vmem:[%s202 + $0x1b0] sm:$0xff] %v1601
        %2114 = vst [vmem:[%s202 + $0x1b8] sm:$0xff] %v1602
        %2115 = vst [vmem:[%s202 + $0x1c0] sm:$0xff] %v1603
        %2116 = vst [vmem:[%s202 + $0x1c8] sm:$0xff] %v1604
        %2117 = vst [vmem:[%s202 + $0x1d0] sm:$0xff] %v1605
        %2118 = vst [vmem:[%s202 + $0x1d8] sm:$0xff] %v1606
        %2119 = vst [vmem:[%s202 + $0x1e0] sm:$0xff] %v1607
        %2120 = vst [vmem:[%s202 + $0x1e8] sm:$0xff] %v1608
        %2121 = vst [vmem:[%s202 + $0x1f0] sm:$0xff] %v1609
        %2122 = vst [vmem:[%s202 + $0x1f8] sm:$0xff] %v1610
        %2123 = vst [vmem:[%s202 + $0x200] sm:$0xff] %v1611
        %2124 = vst [vmem:[%s202 + $0x208] sm:$0xff] %v1612
        %2125 = vst [vmem:[%s202 + $0x210] sm:$0xff] %v1613
        %2126 = vst [vmem:[%s202 + $0x218] sm:$0xff] %v1614
        %2127 = vst [vmem:[%s202 + $0x220] sm:$0xff] %v1615
        %2128 = vst [vmem:[%s202 + $0x228] sm:$0xff] %v1616
        %2129 = vst [vmem:[%s202 + $0x230] sm:$0xff] %v1617
        %2130 = vst [vmem:[%s202 + $0x238] sm:$0xff] %v1618
        %2131 = vst [vmem:[%s202 + $0x240] sm:$0xff] %v1619
        %2132 = vst [vmem:[%s202 + $0x248] sm:$0xff] %v1620
        %2133 = vst [vmem:[%s202 + $0x250] sm:$0xff] %v1621
        %2134 = vst [vmem:[%s202 + $0x258] sm:$0xff] %v1622
        %2135 = vst [vmem:[%s202 + $0x260] sm:$0xff] %v1623
        %2136 = vst [vmem:[%s202 + $0x268] sm:$0xff] %v1624
        %2137 = vst [vmem:[%s202 + $0x270] sm:$0xff] %v1625
        %2138 = vst [vmem:[%s202 + $0x278] sm:$0xff] %v1626
        %2139 = vst [vmem:[%s202 + $0x280] sm:$0xff] %v1627
        %2140 = vst [vmem:[%s202 + $0x288] sm:$0xff] %v1628
        %2141 = vst [vmem:[%s202 + $0x290] sm:$0xff] %v1629
        %2142 = vst [vmem:[%s202 + $0x298] sm:$0xff] %v1630
        %2143 = vst [vmem:[%s202 + $0x2a0] sm:$0xff] %v1631
        %2144 = vst [vmem:[%s202 + $0x2a8] sm:$0xff] %v1632
        %2145 = vst [vmem:[%s202 + $0x2b0] sm:$0xff] %v1633
        %2146 = vst [vmem:[%s202 + $0x2b8] sm:$0xff] %v1634
        %2147 = vst [vmem:[%s202 + $0x2c0] sm:$0xff] %v1635
        %2148 = vst [vmem:[%s202 + $0x2c8] sm:$0xff] %v1636
        %2149 = vst [vmem:[%s202 + $0x2d0] sm:$0xff] %v1637
        %2150 = vst [vmem:[%s202 + $0x2d8] sm:$0xff] %v1638
        %2151 = vst [vmem:[%s202 + $0x2e0] sm:$0xff] %v1639
        %2152 = vst [vmem:[%s202 + $0x2e8] sm:$0xff] %v1640
        %2153 = vst [vmem:[%s202 + $0x2f0] sm:$0xff] %v1641
        %2154 = vst [vmem:[%s202 + $0x2f8] sm:$0xff] %v1642
        %2155 = vst [vmem:[%s202 + $0x300] sm:$0xff] %v1643
        %2156 = vst [vmem:[%s202 + $0x308] sm:$0xff] %v1644
        %2157 = vst [vmem:[%s202 + $0x310] sm:$0xff] %v1645
        %2158 = vst [vmem:[%s202 + $0x318] sm:$0xff] %v1646
        %2159 = vst [vmem:[%s202 + $0x320] sm:$0xff] %v1647
        %2160 = vst [vmem:[%s202 + $0x328] sm:$0xff] %v1648
        %2161 = vst [vmem:[%s202 + $0x330] sm:$0xff] %v1649
        %2162 = vst [vmem:[%s202 + $0x338] sm:$0xff] %v1650
        %2163 = vst [vmem:[%s202 + $0x340] sm:$0xff] %v1651
        %2164 = vst [vmem:[%s202 + $0x348] sm:$0xff] %v1652
        %2165 = vst [vmem:[%s202 + $0x350] sm:$0xff] %v1653
        %2166 = vst [vmem:[%s202 + $0x358] sm:$0xff] %v1654
        %2167 = vst [vmem:[%s202 + $0x360] sm:$0xff] %v1655
        %2168 = vst [vmem:[%s202 + $0x368] sm:$0xff] %v1656
        %2169 = vst [vmem:[%s202 + $0x370] sm:$0xff] %v1657
        %2170 = vst [vmem:[%s202 + $0x378] sm:$0xff] %v1658
        %2171 = vst [vmem:[%s202 + $0x380] sm:$0xff] %v1659
        %2172 = vst [vmem:[%s202 + $0x388] sm:$0xff] %v1660
        %2173 = vst [vmem:[%s202 + $0x390] sm:$0xff] %v1661
        %2174 = vst [vmem:[%s202 + $0x398] sm:$0xff] %v1662
        %2175 = vst [vmem:[%s202 + $0x3a0] sm:$0xff] %v1663
        %2176 = vst [vmem:[%s202 + $0x3a8] sm:$0xff] %v1664
        %2177 = vst [vmem:[%s202 + $0x3b0] sm:$0xff] %v1665
        %2178 = vst [vmem:[%s202 + $0x3b8] sm:$0xff] %v1666
        %2179 = vst [vmem:[%s202 + $0x3c0] sm:$0xff] %v1667
        %2180 = vst [vmem:[%s202 + $0x3c8] sm:$0xff] %v1668
        %2181 = vst [vmem:[%s202 + $0x3d0] sm:$0xff] %v1669
        %2182 = vst [vmem:[%s202 + $0x3d8] sm:$0xff] %v1670
        %2183 = vst [vmem:[%s202 + $0x3e0] sm:$0xff] %v1671
        %2184 = vst [vmem:[%s202 + $0x3e8] sm:$0xff] %v1672
        %2185 = vst [vmem:[%s202 + $0x3f0] sm:$0xff] %v1673
        %2186 = vst [vmem:[%s202 + $0x3f8] sm:$0xff] %v1674
        %2187 = vst [vmem:[%s202 + $0x400] sm:$0xff] %v1675
        %2188 = vst [vmem:[%s202 + $0x408] sm:$0xff] %v1676
        %2189 = vst [vmem:[%s202 + $0x410] sm:$0xff] %v1677
        %2190 = vst [vmem:[%s202 + $0x418] sm:$0xff] %v1678
        %2191 = vst [vmem:[%s202 + $0x420] sm:$0xff] %v1679
        %2192 = vst [vmem:[%s202 + $0x428] sm:$0xff] %v1680
        %2193 = vst [vmem:[%s202 + $0x430] sm:$0xff] %v1681
        %2194 = vst [vmem:[%s202 + $0x438] sm:$0xff] %v1682
        %2195 = vst [vmem:[%s202 + $0x440] sm:$0xff] %v1683
        %2196 = vst [vmem:[%s202 + $0x448] sm:$0xff] %v1684
        %2197 = vst [vmem:[%s202 + $0x450] sm:$0xff] %v1685
        %2198 = vst [vmem:[%s202 + $0x458] sm:$0xff] %v1686
        %2199 = vst [vmem:[%s202 + $0x460] sm:$0xff] %v1687
        %2200 = vst [vmem:[%s202 + $0x468] sm:$0xff] %v1688
        %2201 = vst [vmem:[%s202 + $0x470] sm:$0xff] %v1689
        %2202 = vst [vmem:[%s202 + $0x478] sm:$0xff] %v1690
        %2203 = vst [vmem:[%s202 + $0x480] sm:$0xff] %v1691
        %2204 = vst [vmem:[%s202 + $0x488] sm:$0xff] %v1692
        %2205 = vst [vmem:[%s202 + $0x490] sm:$0xff] %v1693
        %2206 = vst [vmem:[%s202 + $0x498] sm:$0xff] %v1694
        %2207 = vst [vmem:[%s202 + $0x4a0] sm:$0xff] %v1695
        %2208 = vst [vmem:[%s202 + $0x4a8] sm:$0xff] %v1696
        %2209 = vst [vmem:[%s202 + $0x4b0] sm:$0xff] %v1697
        %2210 = vst [vmem:[%s202 + $0x4b8] sm:$0xff] %v1698
        %2211 = vst [vmem:[%s202 + $0x4c0] sm:$0xff] %v1699
        %2212 = vst [vmem:[%s202 + $0x4c8] sm:$0xff] %v1700
        %2213 = vst [vmem:[%s202 + $0x4d0] sm:$0xff] %v1701
        %2214 = vst [vmem:[%s202 + $0x4d8] sm:$0xff] %v1702
        %2215 = vst [vmem:[%s202 + $0x4e0] sm:$0xff] %v1703
        %2216 = vst [vmem:[%s202 + $0x4e8] sm:$0xff] %v1704
        %2217 = vst [vmem:[%s202 + $0x4f0] sm:$0xff] %v1705
        %2218 = vst [vmem:[%s202 + $0x4f8] sm:$0xff] %v1706
        %2219 = vst [vmem:[%s202 + $0x500] sm:$0xff] %v1707
        %2220 = vst [vmem:[%s202 + $0x508] sm:$0xff] %v1708
        %2221 = vst [vmem:[%s202 + $0x510] sm:$0xff] %v1709
        %2222 = vst [vmem:[%s202 + $0x518] sm:$0xff] %v1710
        %2223 = vst [vmem:[%s202 + $0x520] sm:$0xff] %v1711
        %2224 = vst [vmem:[%s202 + $0x528] sm:$0xff] %v1712
        %2225 = vst [vmem:[%s202 + $0x530] sm:$0xff] %v1713
        %2226 = vst [vmem:[%s202 + $0x538] sm:$0xff] %v1714
        %2227 = vst [vmem:[%s202 + $0x540] sm:$0xff] %v1715
        %2228 = vst [vmem:[%s202 + $0x548] sm:$0xff] %v1716
        %2229 = vst [vmem:[%s202 + $0x550] sm:$0xff] %v1717
        %2230 = vst [vmem:[%s202 + $0x558] sm:$0xff] %v1718
        %2231 = vst [vmem:[%s202 + $0x560] sm:$0xff] %v1719
        %2232 = vst [vmem:[%s202 + $0x568] sm:$0xff] %v1720
        %2233 = vst [vmem:[%s202 + $0x570] sm:$0xff] %v1721
        %2234 = vst [vmem:[%s202 + $0x578] sm:$0xff] %v1722
        %2235 = vst [vmem:[%s202 + $0x580] sm:$0xff] %v1723
        %2236 = vst [vmem:[%s202 + $0x588] sm:$0xff] %v1724
        %2237 = vst [vmem:[%s202 + $0x590] sm:$0xff] %v1725
        %2238 = vst [vmem:[%s202 + $0x598] sm:$0xff] %v1726
        %2239 = vst [vmem:[%s202 + $0x5a0] sm:$0xff] %v1727
        %2240 = vst [vmem:[%s202 + $0x5a8] sm:$0xff] %v1728
        %2241 = vst [vmem:[%s202 + $0x5b0] sm:$0xff] %v1729
        %2242 = vst [vmem:[%s202 + $0x5b8] sm:$0xff] %v1730
        %2243 = vst [vmem:[%s202 + $0x5c0] sm:$0xff] %v1731
        %2244 = vst [vmem:[%s202 + $0x5c8] sm:$0xff] %v1732
        %2245 = vst [vmem:[%s202 + $0x5d0] sm:$0xff] %v1733
        %2246 = vst [vmem:[%s202 + $0x5d8] sm:$0xff] %v1734
        %2247 = vst [vmem:[%s202 + $0x5e0] sm:$0xff] %v1735
        %2248 = vst [vmem:[%s202 + $0x5e8] sm:$0xff] %v1736
        %2249 = vst [vmem:[%s202 + $0x5f0] sm:$0xff] %v1737
        %2250 = vst [vmem:[%s202 + $0x5f8] sm:$0xff] %v1738
        %2251 = vst [vmem:[%s202 + $0x600] sm:$0xff] %v1739
        %2252 = vst [vmem:[%s202 + $0x608] sm:$0xff] %v1740
        %2253 = vst [vmem:[%s202 + $0x610] sm:$0xff] %v1741
        %2254 = vst [vmem:[%s202 + $0x618] sm:$0xff] %v1742
        %2255 = vst [vmem:[%s202 + $0x620] sm:$0xff] %v1743
        %2256 = vst [vmem:[%s202 + $0x628] sm:$0xff] %v1744
        %2257 = vst [vmem:[%s202 + $0x630] sm:$0xff] %v1745
        %2258 = vst [vmem:[%s202 + $0x638] sm:$0xff] %v1746
        %2259 = vst [vmem:[%s202 + $0x640] sm:$0xff] %v1747
        %2260 = vst [vmem:[%s202 + $0x648] sm:$0xff] %v1748
        %2261 = vst [vmem:[%s202 + $0x650] sm:$0xff] %v1749
        %2262 = vst [vmem:[%s202 + $0x658] sm:$0xff] %v1750
        %2263 = vst [vmem:[%s202 + $0x660] sm:$0xff] %v1751
        %2264 = vst [vmem:[%s202 + $0x668] sm:$0xff] %v1752
        %2265 = vst [vmem:[%s202 + $0x670] sm:$0xff] %v1753
        %2266 = vst [vmem:[%s202 + $0x678] sm:$0xff] %v1754
        %2267 = vst [vmem:[%s202 + $0x680] sm:$0xff] %v1755
        %2268 = vst [vmem:[%s202 + $0x688] sm:$0xff] %v1756
        %2269 = vst [vmem:[%s202 + $0x690] sm:$0xff] %v1757
        %2270 = vst [vmem:[%s202 + $0x698] sm:$0xff] %v1758
        %2271 = vst [vmem:[%s202 + $0x6a0] sm:$0xff] %v1759
        %2272 = vst [vmem:[%s202 + $0x6a8] sm:$0xff] %v1760
        %2273 = vst [vmem:[%s202 + $0x6b0] sm:$0xff] %v1761
        %2274 = vst [vmem:[%s202 + $0x6b8] sm:$0xff] %v1762
        %2275 = vst [vmem:[%s202 + $0x6c0] sm:$0xff] %v1763
        %2276 = vst [vmem:[%s202 + $0x6c8] sm:$0xff] %v1764
        %2277 = vst [vmem:[%s202 + $0x6d0] sm:$0xff] %v1765
        %2278 = vst [vmem:[%s202 + $0x6d8] sm:$0xff] %v1766
        %2279 = vst [vmem:[%s202 + $0x6e0] sm:$0xff] %v1767
        %2280 = vst [vmem:[%s202 + $0x6e8] sm:$0xff] %v1768
        %2281 = vst [vmem:[%s202 + $0x6f0] sm:$0xff] %v1769
        %2282 = vst [vmem:[%s202 + $0x6f8] sm:$0xff] %v1770
        %2283 = vst [vmem:[%s202 + $0x700] sm:$0xff] %v1771
        %2284 = vst [vmem:[%s202 + $0x708] sm:$0xff] %v1772
        %2285 = vst [vmem:[%s202 + $0x710] sm:$0xff] %v1773
        %2286 = vst [vmem:[%s202 + $0x718] sm:$0xff] %v1774
        %2287 = vst [vmem:[%s202 + $0x720] sm:$0xff] %v1775
        %2288 = vst [vmem:[%s202 + $0x728] sm:$0xff] %v1776
        %2289 = vst [vmem:[%s202 + $0x730] sm:$0xff] %v1777
        %2290 = vst [vmem:[%s202 + $0x738] sm:$0xff] %v1778
        %2291 = vst [vmem:[%s202 + $0x740] sm:$0xff] %v1779
        %2292 = vst [vmem:[%s202 + $0x748] sm:$0xff] %v1780
        %2293 = vst [vmem:[%s202 + $0x750] sm:$0xff] %v1781
        %2294 = vst [vmem:[%s202 + $0x758] sm:$0xff] %v1782
        %2295 = vst [vmem:[%s202 + $0x760] sm:$0xff] %v1783
        %2296 = vst [vmem:[%s202 + $0x768] sm:$0xff] %v1784
        %2297 = vst [vmem:[%s202 + $0x770] sm:$0xff] %v1785
        %2298 = vst [vmem:[%s202 + $0x778] sm:$0xff] %v1786
        %2299 = vst [vmem:[%s202 + $0x780] sm:$0xff] %v1787
        %2300 = vst [vmem:[%s202 + $0x788] sm:$0xff] %v1788
        %2301 = vst [vmem:[%s202 + $0x790] sm:$0xff] %v1789
        %2302 = vst [vmem:[%s202 + $0x798] sm:$0xff] %v1790
        %2303 = vst [vmem:[%s202 + $0x7a0] sm:$0xff] %v1791
        %2304 = vst [vmem:[%s202 + $0x7a8] sm:$0xff] %v1792
        %2305 = vst [vmem:[%s202 + $0x7b0] sm:$0xff] %v1793
        %2306 = vst [vmem:[%s202 + $0x7b8] sm:$0xff] %v1794
        %2307 = vst [vmem:[%s202 + $0x7c0] sm:$0xff] %v1795
        %2308 = vst [vmem:[%s202 + $0x7c8] sm:$0xff] %v1796
        %2309 = vst [vmem:[%s202 + $0x7d0] sm:$0xff] %v1797
        %2310 = vst [vmem:[%s202 + $0x7d8] sm:$0xff] %v1798
        %2311 = vst [vmem:[%s202 + $0x7e0] sm:$0xff] %v1799
        %2312 = vst [vmem:[%s202 + $0x7e8] sm:$0xff] %v1800
        %2313 = vst [vmem:[%s202 + $0x7f0] sm:$0xff] %v1801
        %2314 = vst [vmem:[%s202 + $0x7f8] sm:$0xff] %v1802
        %2315 = vst [vmem:[%s202 + $0x800] sm:$0xff] %v1803
        %2316 = vst [vmem:[%s202 + $0x808] sm:$0xff] %v1804
        %2317 = vst [vmem:[%s202 + $0x810] sm:$0xff] %v1805
        %2318 = vst [vmem:[%s202 + $0x818] sm:$0xff] %v1806
        %2319 = vst [vmem:[%s202 + $0x820] sm:$0xff] %v1807
        %2320 = vst [vmem:[%s202 + $0x828] sm:$0xff] %v1808
        %2321 = vst [vmem:[%s202 + $0x830] sm:$0xff] %v1809
        %2322 = vst [vmem:[%s202 + $0x838] sm:$0xff] %v1810
        %2323 = vst [vmem:[%s202 + $0x840] sm:$0xff] %v1811
        %2324 = vst [vmem:[%s202 + $0x848] sm:$0xff] %v1812
        %2325 = vst [vmem:[%s202 + $0x850] sm:$0xff] %v1813
        %2326 = vst [vmem:[%s202 + $0x858] sm:$0xff] %v1814
        %2327 = vst [vmem:[%s202 + $0x860] sm:$0xff] %v1815
        %2328 = vst [vmem:[%s202 + $0x868] sm:$0xff] %v1816
        %2329 = vst [vmem:[%s202 + $0x870] sm:$0xff] %v1817
        %2330 = vst [vmem:[%s202 + $0x878] sm:$0xff] %v1818
        %2331 = vst [vmem:[%s202 + $0x880] sm:$0xff] %v1819
        %2332 = vst [vmem:[%s202 + $0x888] sm:$0xff] %v1820
        %2333 = vst [vmem:[%s202 + $0x890] sm:$0xff] %v1821
        %2334 = vst [vmem:[%s202 + $0x898] sm:$0xff] %v1822
        %2335 = vst [vmem:[%s202 + $0x8a0] sm:$0xff] %v1823
        %2336 = vst [vmem:[%s202 + $0x8a8] sm:$0xff] %v1824
        %2337 = vst [vmem:[%s202 + $0x8b0] sm:$0xff] %v1825
        %2338 = vst [vmem:[%s202 + $0x8b8] sm:$0xff] %v1826
        %2339 = vst [vmem:[%s202 + $0x8c0] sm:$0xff] %v1827
        %2340 = vst [vmem:[%s202 + $0x8c8] sm:$0xff] %v1828
        %2341 = vst [vmem:[%s202 + $0x8d0] sm:$0xff] %v1829
        %2342 = vst [vmem:[%s202 + $0x8d8] sm:$0xff] %v1830
        %2343 = vst [vmem:[%s202 + $0x8e0] sm:$0xff] %v1831
        %2344 = vst [vmem:[%s202 + $0x8e8] sm:$0xff] %v1832
        %2345 = vst [vmem:[%s202 + $0x8f0] sm:$0xff] %v1833
        %2346 = vst [vmem:[%s202 + $0x8f8] sm:$0xff] %v1834
        %2347 = vst [vmem:[%s202 + $0x900] sm:$0xff] %v1835
        %2348 = vst [vmem:[%s202 + $0x908] sm:$0xff] %v1836
        %2349 = vst [vmem:[%s202 + $0x910] sm:$0xff] %v1837
        %2350 = vst [vmem:[%s202 + $0x918] sm:$0xff] %v1838
        %2351 = vst [vmem:[%s202 + $0x920] sm:$0xff] %v1839
        %2352 = vst [vmem:[%s202 + $0x928] sm:$0xff] %v1840
        %2353 = vst [vmem:[%s202 + $0x930] sm:$0xff] %v1841
        %2354 = vst [vmem:[%s202 + $0x938] sm:$0xff] %v1842
        %2355 = vst [vmem:[%s202 + $0x940] sm:$0xff] %v1843
        %2356 = vst [vmem:[%s202 + $0x948] sm:$0xff] %v1844
        %2357 = vst [vmem:[%s202 + $0x950] sm:$0xff] %v1845
        %2358 = vst [vmem:[%s202 + $0x958] sm:$0xff] %v1846
        %2359 = vst [vmem:[%s202 + $0x960] sm:$0xff] %v1847
        %2360 = vst [vmem:[%s202 + $0x968] sm:$0xff] %v1848
        %2361 = vst [vmem:[%s202 + $0x970] sm:$0xff] %v1849
        %2362 = vst [vmem:[%s202 + $0x978] sm:$0xff] %v1850
        %2363 = vst [vmem:[%s202 + $0x980] sm:$0xff] %v1851
        %2364 = vst [vmem:[%s202 + $0x988] sm:$0xff] %v1852
        %2365 = vst [vmem:[%s202 + $0x990] sm:$0xff] %v1853
        %2366 = vst [vmem:[%s202 + $0x998] sm:$0xff] %v1854
        %2367 = vst [vmem:[%s202 + $0x9a0] sm:$0xff] %v1855
        %2368 = vst [vmem:[%s202 + $0x9a8] sm:$0xff] %v1856
        %2369 = vst [vmem:[%s202 + $0x9b0] sm:$0xff] %v1857
        %2370 = vst [vmem:[%s202 + $0x9b8] sm:$0xff] %v1858
        %2371 = vst [vmem:[%s202 + $0x9c0] sm:$0xff] %v1859
        %2372 = vst [vmem:[%s202 + $0x9c8] sm:$0xff] %v1860
        %2373 = vst [vmem:[%s202 + $0x9d0] sm:$0xff] %v1861
        %2374 = vst [vmem:[%s202 + $0x9d8] sm:$0xff] %v1862
        %2375 = vst [vmem:[%s202 + $0x9e0] sm:$0xff] %v1863
        %2376 = vst [vmem:[%s202 + $0x9e8] sm:$0xff] %v1864
        %2377 = vst [vmem:[%s202 + $0x9f0] sm:$0xff] %v1865
        %2378 = vst [vmem:[%s202 + $0x9f8] sm:$0xff] %v1866
        %2379 = vst [vmem:[%s202 + $0xa00] sm:$0xff] %v1867
        %2380 = vst [vmem:[%s202 + $0xa08] sm:$0xff] %v1868
        %2381 = vst [vmem:[%s202 + $0xa10] sm:$0xff] %v1869
        %2382 = vst [vmem:[%s202 + $0xa18] sm:$0xff] %v1870
        %2383 = vst [vmem:[%s202 + $0xa20] sm:$0xff] %v1871
        %2384 = vst [vmem:[%s202 + $0xa28] sm:$0xff] %v1872
        %2385 = vst [vmem:[%s202 + $0xa30] sm:$0xff] %v1873
        %2386 = vst [vmem:[%s202 + $0xa38] sm:$0xff] %v1874
        %2387 = vst [vmem:[%s202 + $0xa40] sm:$0xff] %v1875
        %2388 = vst [vmem:[%s202 + $0xa48] sm:$0xff] %v1876
        %2389 = vst [vmem:[%s202 + $0xa50] sm:$0xff] %v1877
        %2390 = vst [vmem:[%s202 + $0xa58] sm:$0xff] %v1878
        %2391 = vst [vmem:[%s202 + $0xa60] sm:$0xff] %v1879
        %2392 = vst [vmem:[%s202 + $0xa68] sm:$0xff] %v1880
        %2393 = vst [vmem:[%s202 + $0xa70] sm:$0xff] %v1881
        %2394 = vst [vmem:[%s202 + $0xa78] sm:$0xff] %v1882
        %2395 = vst [vmem:[%s202 + $0xa80] sm:$0xff] %v1883
        %2396 = vst [vmem:[%s202 + $0xa88] sm:$0xff] %v1884
        %2397 = vst [vmem:[%s202 + $0xa90] sm:$0xff] %v1885
        %2398 = vst [vmem:[%s202 + $0xa98] sm:$0xff] %v1886
        %2399 = vst [vmem:[%s202 + $0xaa0] sm:$0xff] %v1887
        %2400 = vst [vmem:[%s202 + $0xaa8] sm:$0xff] %v1888
        %2401 = vst [vmem:[%s202 + $0xab0] sm:$0xff] %v1889
        %2402 = vst [vmem:[%s202 + $0xab8] sm:$0xff] %v1890
        %2403 = vst [vmem:[%s202 + $0xac0] sm:$0xff] %v1891
        %2404 = vst [vmem:[%s202 + $0xac8] sm:$0xff] %v1892
        %2405 = vst [vmem:[%s202 + $0xad0] sm:$0xff] %v1893
        %2406 = vst [vmem:[%s202 + $0xad8] sm:$0xff] %v1894
        %2407 = vst [vmem:[%s202 + $0xae0] sm:$0xff] %v1895
        %2408 = vst [vmem:[%s202 + $0xae8] sm:$0xff] %v1896
        %2409 = vst [vmem:[%s202 + $0xaf0] sm:$0xff] %v1897
        %2410 = vst [vmem:[%s202 + $0xaf8] sm:$0xff] %v1898
        %2411 = vst [vmem:[%s202 + $0xb00] sm:$0xff] %v1899
        %2412 = vst [vmem:[%s202 + $0xb08] sm:$0xff] %v1900
        %2413 = vst [vmem:[%s202 + $0xb10] sm:$0xff] %v1901
        %2414 = vst [vmem:[%s202 + $0xb18] sm:$0xff] %v1902
        %2415 = vst [vmem:[%s202 + $0xb20] sm:$0xff] %v1903
        %2416 = vst [vmem:[%s202 + $0xb28] sm:$0xff] %v1904
        %2417 = vst [vmem:[%s202 + $0xb30] sm:$0xff] %v1905
        %2418 = vst [vmem:[%s202 + $0xb38] sm:$0xff] %v1906
        %2419 = vst [vmem:[%s202 + $0xb40] sm:$0xff] %v1907
        %2420 = vst [vmem:[%s202 + $0xb48] sm:$0xff] %v1908
        %2421 = vst [vmem:[%s202 + $0xb50] sm:$0xff] %v1909
        %2422 = vst [vmem:[%s202 + $0xb58] sm:$0xff] %v1910
        %2423 = vst [vmem:[%s202 + $0xb60] sm:$0xff] %v1911
        %2424 = vst [vmem:[%s202 + $0xb68] sm:$0xff] %v1912
        %2425 = vst [vmem:[%s202 + $0xb70] sm:$0xff] %v1913
        %2426 = vst [vmem:[%s202 + $0xb78] sm:$0xff] %v1914
        %2427 = vst [vmem:[%s202 + $0xb80] sm:$0xff] %v1915
        %2428 = vst [vmem:[%s202 + $0xb88] sm:$0xff] %v1916
        %2429 = vst [vmem:[%s202 + $0xb90] sm:$0xff] %v1917
        %2430 = vst [vmem:[%s202 + $0xb98] sm:$0xff] %v1918
        %2431 = vst [vmem:[%s202 + $0xba0] sm:$0xff] %v1919
        %2432 = vst [vmem:[%s202 + $0xba8] sm:$0xff] %v1920
        %2433 = vst [vmem:[%s202 + $0xbb0] sm:$0xff] %v1921
        %2434 = vst [vmem:[%s202 + $0xbb8] sm:$0xff] %v1922
        %2435 = vst [vmem:[%s202 + $0xbc0] sm:$0xff] %v1923
        %2436 = vst [vmem:[%s202 + $0xbc8] sm:$0xff] %v1924
        %2437 = vst [vmem:[%s202 + $0xbd0] sm:$0xff] %v1925
        %2438 = vst [vmem:[%s202 + $0xbd8] sm:$0xff] %v1926
        %2439 = vst [vmem:[%s202 + $0xbe0] sm:$0xff] %v1927
        %2440 = vst [vmem:[%s202 + $0xbe8] sm:$0xff] %v1928
        %2441 = vst [vmem:[%s202 + $0xbf0] sm:$0xff] %v1929
        %2442 = vst [vmem:[%s202 + $0xbf8] sm:$0xff] %v1930
        %2443 = vst [vmem:[%s202 + $0xc00] sm:$0xff] %v1931
        %2444 = vst [vmem:[%s202 + $0xc08] sm:$0xff] %v1932
        %2445 = vst [vmem:[%s202 + $0xc10] sm:$0xff] %v1933
        %2446 = vst [vmem:[%s202 + $0xc18] sm:$0xff] %v1934
        %2447 = vst [vmem:[%s202 + $0xc20] sm:$0xff] %v1935
        %2448 = vst [vmem:[%s202 + $0xc28] sm:$0xff] %v1936
        %2449 = vst [vmem:[%s202 + $0xc30] sm:$0xff] %v1937
        %2450 = vst [vmem:[%s202 + $0xc38] sm:$0xff] %v1938
        %2451 = vst [vmem:[%s202 + $0xc40] sm:$0xff] %v1939
        %2452 = vst [vmem:[%s202 + $0xc48] sm:$0xff] %v1940
        %2453 = vst [vmem:[%s202 + $0xc50] sm:$0xff] %v1941
        %2454 = vst [vmem:[%s202 + $0xc58] sm:$0xff] %v1942
        %2455 = vst [vmem:[%s202 + $0xc60] sm:$0xff] %v1943
        %2456 = vst [vmem:[%s202 + $0xc68] sm:$0xff] %v1944
        %2457 = vst [vmem:[%s202 + $0xc70] sm:$0xff] %v1945
        %2458 = vst [vmem:[%s202 + $0xc78] sm:$0xff] %v1946
        %2459 = vst [vmem:[%s202 + $0xc80] sm:$0xff] %v1947
        %2460 = vst [vmem:[%s202 + $0xc88] sm:$0xff] %v1948
        %2461 = vst [vmem:[%s202 + $0xc90] sm:$0xff] %v1949
        %2462 = vst [vmem:[%s202 + $0xc98] sm:$0xff] %v1950
        %2463 = vst [vmem:[%s202 + $0xca0] sm:$0xff] %v1951
        %2464 = vst [vmem:[%s202 + $0xca8] sm:$0xff] %v1952
        %2465 = vst [vmem:[%s202 + $0xcb0] sm:$0xff] %v1953
        %2466 = vst [vmem:[%s202 + $0xcb8] sm:$0xff] %v1954
        %2467 = vst [vmem:[%s202 + $0xcc0] sm:$0xff] %v1955
        %2468 = vst [vmem:[%s202 + $0xcc8] sm:$0xff] %v1956
        %2469 = vst [vmem:[%s202 + $0xcd0] sm:$0xff] %v1957
        %2470 = vst [vmem:[%s202 + $0xcd8] sm:$0xff] %v1958
        %2471 = vst [vmem:[%s202 + $0xce0] sm:$0xff] %v1959
        %2472 = vst [vmem:[%s202 + $0xce8] sm:$0xff] %v1960
        %2473 = vst [vmem:[%s202 + $0xcf0] sm:$0xff] %v1961
        %2474 = vst [vmem:[%s202 + $0xcf8] sm:$0xff] %v1962
        %2475 = vst [vmem:[%s202 + $0xd00] sm:$0xff] %v1963
        %2476 = vst [vmem:[%s202 + $0xd08] sm:$0xff] %v1964
        %2477 = vst [vmem:[%s202 + $0xd10] sm:$0xff] %v1965
        %2478 = vst [vmem:[%s202 + $0xd18] sm:$0xff] %v1966
        %2479 = vst [vmem:[%s202 + $0xd20] sm:$0xff] %v1967
        %2480 = vst [vmem:[%s202 + $0xd28] sm:$0xff] %v1968
        %2481 = vst [vmem:[%s202 + $0xd30] sm:$0xff] %v1969
        %2482 = vst [vmem:[%s202 + $0xd38] sm:$0xff] %v1970
        %2483 = vst [vmem:[%s202 + $0xd40] sm:$0xff] %v1971
        %2484 = vst [vmem:[%s202 + $0xd48] sm:$0xff] %v1972
        %2485 = vst [vmem:[%s202 + $0xd50] sm:$0xff] %v1973
        %2486 = vst [vmem:[%s202 + $0xd58] sm:$0xff] %v1974
        %2487 = vst [vmem:[%s202 + $0xd60] sm:$0xff] %v1975
        %2488 = vst [vmem:[%s202 + $0xd68] sm:$0xff] %v1976
        %2489 = vst [vmem:[%s202 + $0xd70] sm:$0xff] %v1977
        %2490 = vst [vmem:[%s202 + $0xd78] sm:$0xff] %v1978
        %2491 = vst [vmem:[%s202 + $0xd80] sm:$0xff] %v1979
        %2492 = vst [vmem:[%s202 + $0xd88] sm:$0xff] %v1980
        %2493 = vst [vmem:[%s202 + $0xd90] sm:$0xff] %v1981
        %2494 = vst [vmem:[%s202 + $0xd98] sm:$0xff] %v1982
        %2495 = vst [vmem:[%s202 + $0xda0] sm:$0xff] %v1983
        %2496 = vst [vmem:[%s202 + $0xda8] sm:$0xff] %v1984
        %2497 = vst [vmem:[%s202 + $0xdb0] sm:$0xff] %v1985
        %2498 = vst [vmem:[%s202 + $0xdb8] sm:$0xff] %v1986
        %2499 = vst [vmem:[%s202 + $0xdc0] sm:$0xff] %v1987
        %2500 = vst [vmem:[%s202 + $0xdc8] sm:$0xff] %v1988
        %2501 = vst [vmem:[%s202 + $0xdd0] sm:$0xff] %v1989
        %2502 = vst [vmem:[%s202 + $0xdd8] sm:$0xff] %v1990
        %2503 = vst [vmem:[%s202 + $0xde0] sm:$0xff] %v1991
        %2504 = vst [vmem:[%s202 + $0xde8] sm:$0xff] %v1992
        %2505 = vst [vmem:[%s202 + $0xdf0] sm:$0xff] %v1993
        %2506 = vst [vmem:[%s202 + $0xdf8] sm:$0xff] %v1994
        %2507 = vst [vmem:[%s202 + $0xe00] sm:$0xff] %v1995
        %2508 = vst [vmem:[%s202 + $0xe08] sm:$0xff] %v1996
        %2509 = vst [vmem:[%s202 + $0xe10] sm:$0xff] %v1997
        %2510 = vst [vmem:[%s202 + $0xe18] sm:$0xff] %v1998
        %2511 = vst [vmem:[%s202 + $0xe20] sm:$0xff] %v1999
        %2512 = vst [vmem:[%s202 + $0xe28] sm:$0xff] %v2000
        %2513 = vst [vmem:[%s202 + $0xe30] sm:$0xff] %v2001
        %2514 = vst [vmem:[%s202 + $0xe38] sm:$0xff] %v2002
        %2515 = vst [vmem:[%s202 + $0xe40] sm:$0xff] %v2003
        %2516 = vst [vmem:[%s202 + $0xe48] sm:$0xff] %v2004
        %2517 = vst [vmem:[%s202 + $0xe50] sm:$0xff] %v2005
        %2518 = vst [vmem:[%s202 + $0xe58] sm:$0xff] %v2006
        %2519 = vst [vmem:[%s202 + $0xe60] sm:$0xff] %v2007
        %2520 = vst [vmem:[%s202 + $0xe68] sm:$0xff] %v2008
        %2521 = vst [vmem:[%s202 + $0xe70] sm:$0xff] %v2009
        %2522 = vst [vmem:[%s202 + $0xe78] sm:$0xff] %v2010
        %2523 = vst [vmem:[%s202 + $0xe80] sm:$0xff] %v2011
        %2524 = vst [vmem:[%s202 + $0xe88] sm:$0xff] %v2012
        %2525 = vst [vmem:[%s202 + $0xe90] sm:$0xff] %v2013
        %2526 = vst [vmem:[%s202 + $0xe98] sm:$0xff] %v2014
        %2527 = vst [vmem:[%s202 + $0xea0] sm:$0xff] %v2015
        %2528 = vst [vmem:[%s202 + $0xea8] sm:$0xff] %v2016
        %2529 = vst [vmem:[%s202 + $0xeb0] sm:$0xff] %v2017
        %2530 = vst [vmem:[%s202 + $0xeb8] sm:$0xff] %v2018
        %2531 = vst [vmem:[%s202 + $0xec0] sm:$0xff] %v2019
        %2532 = vst [vmem:[%s202 + $0xec8] sm:$0xff] %v2020
        %2533 = vst [vmem:[%s202 + $0xed0] sm:$0xff] %v2021
        %2534 = vst [vmem:[%s202 + $0xed8] sm:$0xff] %v2022
        %2535 = vst [vmem:[%s202 + $0xee0] sm:$0xff] %v2023
        %2536 = vst [vmem:[%s202 + $0xee8] sm:$0xff] %v2024
        %2537 = vst [vmem:[%s202 + $0xef0] sm:$0xff] %v2025
        %2538 = vst [vmem:[%s202 + $0xef8] sm:$0xff] %v2026
        %2539 = vst [vmem:[%s202 + $0xf00] sm:$0xff] %v2027
        %2540 = vst [vmem:[%s202 + $0xf08] sm:$0xff] %v2028
        %2541 = vst [vmem:[%s202 + $0xf10] sm:$0xff] %v2029
        %2542 = vst [vmem:[%s202 + $0xf18] sm:$0xff] %v2030
        %2543 = vst [vmem:[%s202 + $0xf20] sm:$0xff] %v2031
        %2544 = vst [vmem:[%s202 + $0xf28] sm:$0xff] %v2032
        %2545 = vst [vmem:[%s202 + $0xf30] sm:$0xff] %v2033
        %2546 = vst [vmem:[%s202 + $0xf38] sm:$0xff] %v2034
        %2547 = vst [vmem:[%s202 + $0xf40] sm:$0xff] %v2035
        %2548 = vst [vmem:[%s202 + $0xf48] sm:$0xff] %v2036
        %2549 = vst [vmem:[%s202 + $0xf50] sm:$0xff] %v2037
        %2550 = vst [vmem:[%s202 + $0xf58] sm:$0xff] %v2038
        %2551 = vst [vmem:[%s202 + $0xf60] sm:$0xff] %v2039
        %2552 = vst [vmem:[%s202 + $0xf68] sm:$0xff] %v2040
        %2553 = vst [vmem:[%s202 + $0xf70] sm:$0xff] %v2041
        %2554 = vst [vmem:[%s202 + $0xf78] sm:$0xff] %v2042
        %2555 = vst [vmem:[%s202 + $0xf80] sm:$0xff] %v2043
        %2556 = vst [vmem:[%s202 + $0xf88] sm:$0xff] %v2044
        %2557 = vst [vmem:[%s202 + $0xf90] sm:$0xff] %v2045
        %2558 = vst [vmem:[%s202 + $0xf98] sm:$0xff] %v2046
        %2559 = vst [vmem:[%s202 + $0xfa0] sm:$0xff] %v2047
        %2560 = vst [vmem:[%s202 + $0xfa8] sm:$0xff] %v2048
        %2561 = vst [vmem:[%s202 + $0xfb0] sm:$0xff] %v2049
        %2562 = vst [vmem:[%s202 + $0xfb8] sm:$0xff] %v2050
        %2563 = vst [vmem:[%s202 + $0xfc0] sm:$0xff] %v2051
        %2564 = vst [vmem:[%s202 + $0xfc8] sm:$0xff] %v2052
        %2565 = vst [vmem:[%s202 + $0xfd0] sm:$0xff] %v2053
        %2566 = vst [vmem:[%s202 + $0xfd8] sm:$0xff] %v2054
        %2567 = vst [vmem:[%s202 + $0xfe0] sm:$0xff] %v2055
        %2568 = vst [vmem:[%s202 + $0xfe8] sm:$0xff] %v2056
        %2569 = vst [vmem:[%s202 + $0xff0] sm:$0xff] %v2057
        %2570 = vst [vmem:[%s202 + $0xff8] sm:$0xff] %v2058
        %s2571 = sand.u32 %s95, 1
        %s2572 = scalar_lea.sflag [#allocation4], %s2571
        %s2573 = sand.u32 %s95, 1
        %s2574 = smul.addr %s2573, 4096
        %s2575 = scalar_lea.vmem [#allocation7], %s2574
        // Predicated region
        $region41: #{tpu_custom_call.1} parent=31 // pred_check
          %p2576 = pneg %p105
        $region42: #{tpu_custom_call.1} parent=31 // pred_check_branch
          %2578 = sbr.rel (%p2576) target = $region44
        $region43: #{tpu_custom_call.1} parent=31 // pred_region
          %s2579 = smul.u32 128, %s19
          %s2580 = ssub.s32 625, %s2579
          %p2581 = scmp.lt.s32.totalorder %s2580, 128
          %s2582 = scalar_select %p2581, %s2580, 128
          %s2583 = smul.u32 128, %s2582
          %s2584 = smul.u32 %s2583, 4
          %s2586 = ssub.s32 65536, %s2584
          %2587 = vsyncadd %s2572, %s2586
          %p2588 = scmp.ne.s32.totalorder 0, %s2584
          %s2589 = smul.addr %s2579, 4
          %s2590 = smul.addr %s2589, 128
          %s2591 = scalar_lea.hbm %s3, %s2590
          %s2592 = smul.u32 32, %s2582
          %s2593 = sshll.u32 %s2575, 4
          %s2594 = int_to_ptr.vmem [resolvable:$true] %s2593
          %s2595 = sshll.u32 %s2592, 4
          %2599 = dma.vmem_to_hbm [thread:$0]  (%p2588), %s2594, %s2595, %s2591, %s2572, 512, 512, 32
        $region44: #{tpu_custom_call.1} parent=31 // pred_fallthru
          _
      $region32: #{tpu_custom_call.1} parent=5 // pred_fallthru
        _
      %p2600 = scmp.le.s32.totalorder 2, %s14
      // Predicated region
      $region45: #{tpu_custom_call.1} parent=5 // pred_check
        %p2601 = pneg %p2600
      $region46: #{tpu_custom_call.1} parent=5 // pred_check_branch
        %2603 = sbr.rel (%p2601) target = $region48
      $region47: #{tpu_custom_call.1} parent=5 // pred_region
        %s2604 = ssub.s32 %s14, 2
        // Predicated region
        $region49: #{tpu_custom_call.1} parent=47 // pred_check
          %p2605 = pneg %p111
        $region50: #{tpu_custom_call.1} parent=47 // pred_check_branch
          %2607 = sbr.rel (%p2605) target = $region52
        $region51: #{tpu_custom_call.1} parent=47 // pred_region
          %s2608 = sand.u32 %s96, 1
          %s2609 = scalar_lea.sflag [#allocation4], %s2608
          %s2610 = sand.u32 %s96, 1
          %s2611 = smul.addr %s2610, 4096
          %s2612 = scalar_lea.vmem [#allocation7], %s2611
          %2613 = dma.done %s2609, 65536
        $region52: #{tpu_custom_call.1} parent=47 // pred_fallthru
          _
      $region48: #{tpu_custom_call.1} parent=5 // pred_fallthru
        _
    $region6: #{tpu_custom_call.1} parent=1 // loop_footer
      %s18 = sadd.s32 1, %s14
    $region7: #{tpu_custom_call.1} parent=1 // loop_footer_branch
      %13 = sbr.rel target = $region3
    $region8: #{tpu_custom_call.1} parent=1 // loop_exit
      _
    %2614 = vsyncpa [#allocation3], 1
    %s2615 = scalar_lea.sflag [#allocation3], 1
    %2616 = vsyncpa %s2615, 1
    %2617 = vsyncpa [#allocation6], 1
    %2618 = vsyncpa [#allocation4], 1
    %s2619 = scalar_lea.sflag [#allocation4], 1
    %2620 = vsyncpa %s2619, 1

</llo_original>
